<compile_context>
chip_gen: v7x
topology: tpu7x:2x2x1
jax: 0.10.0
libtpu: 0.0.40
codegen_flags: <defaults>
</compile_context>

<pallas_src>
import jax
import jax.numpy as jnp
from jax.experimental import pallas as pl
from jax.experimental.pallas import tpu as pltpu

# ---- model hyper-parameters (small, forward-consistent shapes) -------------
IN_DIM = 64
LATENT_DIM = 8
NUM_CENTERS = 16
ENC_LAYERS = (32, 32)
DEC_LAYERS = (32, 32)
RBF_BETA = 2.0
REC_B = 1e-6
BATCH = 32          # demo batch; kernel grids over it in TB-row tiles


def _softplus(x):
    # numerically stable softplus, pure VPU/EUP ops
    return jnp.maximum(x, 0.0) + jnp.log1p(jnp.exp(-jnp.abs(x)))


def vae_forward_kernel(
    # inputs (activations tiled over batch, weights resident)
    x_ref, eps_ref,
    we1_ref, be1_ref, we2_ref, be2_ref,
    wmuvar_ref, bmuvar_ref,
    wd1_ref, bd1_ref, wd2_ref, bd2_ref,
    wpmu_ref, bpmu_ref,
    centers_t_ref, csq_ref, wpos_ref,
    # outputs (lane-dense packed)
    recon_ref,    # (TB, 2*IN_DIM)      = [p_mu | p_var]
    latent_ref,   # (TB, 3*LATENT_DIM)  = [z | q_mu | q_var]
):
    x = x_ref[...]

    # ---------------- encoder MLP (act = Tanh) ----------------
    h = jnp.tanh(jnp.dot(x, we1_ref[...], preferred_element_type=jnp.float32)
                 + be1_ref[...])
    h = jnp.tanh(jnp.dot(h, we2_ref[...], preferred_element_type=jnp.float32)
                 + be2_ref[...])

    # ---------------- fused q_mu / q_var head (one MXU push) ----------------
    head = (jnp.dot(h, wmuvar_ref[...], preferred_element_type=jnp.float32)
            + bmuvar_ref[...])                              # (TB, 2L)
    q_mu = head[:, :LATENT_DIM]
    # Softplus() then Hardtanh(min=1e-4, max=5.0)
    q_var = jnp.clip(_softplus(head[:, LATENT_DIM:]), 0.0001, 5.0)

    # ---------------- reparameterize ----------------
    z = q_mu + eps_ref[...] * jnp.sqrt(q_var)

    # ---------------- decoder MLP (act = Tanh) ----------------
    hd = jnp.tanh(jnp.dot(z, wd1_ref[...], preferred_element_type=jnp.float32)
                  + bd1_ref[...])
    hd = jnp.tanh(jnp.dot(hd, wd2_ref[...], preferred_element_type=jnp.float32)
                  + bd2_ref[...])

    # ---------------- p_mu (out_fn = Sigmoid) ----------------
    p_mu = jax.nn.sigmoid(
        jnp.dot(hd, wpmu_ref[...], preferred_element_type=jnp.float32)
        + bpmu_ref[...])

    # ------ p_sigma path: RBF -> PosLinear (precomputed) -> Reciprocal ------
    z_sq = jnp.sum(z * z, axis=-1, keepdims=True)           # (TB, 1)
    # centers pre-transposed to (L, K) -> canonical x @ W MXU path
    cross = jnp.dot(z, centers_t_ref[...],
                    preferred_element_type=jnp.float32)     # (TB, K)
    d2 = jnp.maximum(z_sq + csq_ref[...] - 2.0 * cross, 0.0)
    rbf = jnp.exp(-RBF_BETA * d2)                           # (TB, K)

    # softplus(W_pos) is hoisted to param prep; wpos_ref is already positive
    lin = jnp.dot(rbf, wpos_ref[...],
                  preferred_element_type=jnp.float32)       # (TB, IN_DIM)
    # sigma = sqrt(1/(lin + b)); forward returns sigma**2.
    # Exact reciprocal kept for numerical parity with the PyTorch reference.
    p_var = pl.reciprocal(lin + REC_B, approx=False)

    # ---------------- lane-dense packed stores ----------------
    recon_ref[...] = jnp.concatenate([p_mu, p_var], axis=-1)       # (TB, 128)
    latent_ref[...] = jnp.concatenate([z, q_mu, q_var], axis=-1)   # (TB, 24)


def _pick_block_batch(batch):
    """Largest batch tile <= 1024 rows that divides `batch` and is 8-aligned."""
    if batch % 8 != 0:
        return batch                       # full-dim block is always legal
    cap = min(batch, 1024)
    for tb in range(cap - (cap % 8), 7, -8):
        if batch % tb == 0:
            return tb
    return batch


def vae_forward(x, eps, params, *, block_batch=None):
    B = x.shape[0]
    f32 = jnp.float32
    TB = block_batch if block_batch is not None else _pick_block_batch(B)
    assert B % TB == 0, "block_batch must divide batch"
    grid = (B // TB,)

    def act_spec(feat):
        # batch-tiled activation / output spec
        return pl.BlockSpec((TB, feat), lambda i: (i, 0))

    def pinned(arr):
        # weights/biases: constant block index -> fetched once, stay resident
        return pl.BlockSpec(arr.shape, lambda i: (0, 0))

    in_specs = [act_spec(IN_DIM), act_spec(LATENT_DIM)] + [pinned(p) for p in params]
    out_specs = (act_spec(2 * IN_DIM), act_spec(3 * LATENT_DIM))
    out_shape = (
        jax.ShapeDtypeStruct((B, 2 * IN_DIM), f32),       # [p_mu | p_var]
        jax.ShapeDtypeStruct((B, 3 * LATENT_DIM), f32),   # [z | q_mu | q_var]
    )

    # VMEM sizing: double-buffered activation tiles + resident weights.
    act_bytes = 4 * TB * (IN_DIM + LATENT_DIM + 2 * IN_DIM + 3 * LATENT_DIM)
    weight_bytes = sum(int(p.size) * 4 for p in params)
    est = 2 * act_bytes + weight_bytes + (1 << 20)
    # Only raise the scoped limit if the tile would not fit v5e's 16 MiB default;
    # cap well under v7x's 64 MiB physical VMEM.
    vmem_limit = min(2 * est, 48 << 20) if est > (16 << 20) else None

    recon, latent = pl.pallas_call(
        vae_forward_kernel,
        grid=grid,
        in_specs=in_specs,
        out_specs=out_specs,
        out_shape=out_shape,
        compiler_params=pltpu.CompilerParams(
            dimension_semantics=("parallel",),   # shard batch tiles on v7x dual-TC
            vmem_limit_bytes=vmem_limit,
        ),
    )(x, eps, *params)

    p_mu = recon[:, :IN_DIM]
    p_var = recon[:, IN_DIM:]
    z = latent[:, :LATENT_DIM]
    q_mu = latent[:, LATENT_DIM:2 * LATENT_DIM]
    q_var = latent[:, 2 * LATENT_DIM:]
    # num_components == 1 branch: constant standard-Normal prior (wrapper-side)
    pr_mu = jnp.zeros_like(q_mu)
    pr_var = jnp.ones_like(q_var)
    # TODO(synk): num_components > 1 (VampPrior / encode_prior) path not implemented.
    return p_mu, p_var, z, q_mu, q_var, pr_mu, pr_var


def make_params(key):
    """Deterministic synthetic parameters (shapes per VAE.__init__), with all
    weight-only preprocessing done here (outside the kernel)."""
    ks = iter(jax.random.split(key, 32))
    f32 = jnp.float32

    def lin(kin, kout):
        w = 0.1 * jax.random.normal(next(ks), (kin, kout), dtype=f32)
        b = 0.1 * jax.random.normal(next(ks), (1, kout), dtype=f32)
        return w, b

    we1, be1 = lin(IN_DIM, ENC_LAYERS[0])
    we2, be2 = lin(ENC_LAYERS[0], ENC_LAYERS[1])
    wmu, bmu = lin(ENC_LAYERS[1], LATENT_DIM)
    wvar, bvar = lin(ENC_LAYERS[1], LATENT_DIM)
    wd1, bd1 = lin(LATENT_DIM, DEC_LAYERS[0])
    wd2, bd2 = lin(DEC_LAYERS[0], DEC_LAYERS[1])
    wpmu, bpmu = lin(DEC_LAYERS[1], IN_DIM)
    centers = jax.random.normal(next(ks), (NUM_CENTERS, LATENT_DIM), dtype=f32)
    wpos_raw = 0.1 * jax.random.normal(next(ks), (NUM_CENTERS, IN_DIM), dtype=f32)

    # ---- param prep (one-time, outside the kernel) ----
    wmuvar = jnp.concatenate([wmu, wvar], axis=1)            # fused head (32, 2L)
    bmuvar = jnp.concatenate([bmu, bvar], axis=1)            # (1, 2L)
    centers_t = jnp.transpose(centers)                       # (L, K) for z @ C^T
    csq = jnp.sum(centers * centers, axis=-1).reshape(1, NUM_CENTERS)
    wpos = jax.nn.softplus(wpos_raw)                         # PosLinear weights >= 0

    return (we1, be1, we2, be2, wmuvar, bmuvar,
            wd1, bd1, wd2, bd2, wpmu, bpmu,
            centers_t, csq, wpos)


if __name__ == "__main__":
    key = jax.random.PRNGKey(0)
    k_x, k_eps, k_p = jax.random.split(key, 3)

    x = jax.random.uniform(k_x, (BATCH, IN_DIM), dtype=jnp.float32)
    # eps plays the role of torch.randn_like(var) in reparameterize
    eps = jax.random.normal(k_eps, (BATCH, LATENT_DIM), dtype=jnp.float32)
    params = make_params(k_p)

    # block_batch=8 exercises a multi-step (grid=(4,)) pipeline at this small batch;
    # for real batches the auto-picker selects tiles up to 1024 rows.
    outs = vae_forward(x, eps, params, block_batch=8)
    outs = jax.block_until_ready(outs)
    p_mu, p_var, z, q_mu, q_var, pr_mu, pr_var = outs

    assert p_mu.shape == (BATCH, IN_DIM) and p_var.shape == (BATCH, IN_DIM)
    assert z.shape == (BATCH, LATENT_DIM)
    assert q_mu.shape == q_var.shape == pr_mu.shape == pr_var.shape == (BATCH, LATENT_DIM)
    assert bool(jnp.all(jnp.isfinite(p_mu))) and bool(jnp.all(jnp.isfinite(p_var)))
    print("KERNEL_OK")
</pallas_src>

<mosaic_0001>
module attributes {stable_mosaic.version = 11 : i64} {
  func.func @vae_forward_kernel(%arg0: i32, %arg1: memref<8x64xf32, #tpu.memory_space<vmem>>, %arg2: memref<8x8xf32, #tpu.memory_space<vmem>>, %arg3: memref<64x32xf32, #tpu.memory_space<vmem>>, %arg4: memref<1x32xf32, #tpu.memory_space<vmem>>, %arg5: memref<32x32xf32, #tpu.memory_space<vmem>>, %arg6: memref<1x32xf32, #tpu.memory_space<vmem>>, %arg7: memref<32x16xf32, #tpu.memory_space<vmem>>, %arg8: memref<1x16xf32, #tpu.memory_space<vmem>>, %arg9: memref<8x32xf32, #tpu.memory_space<vmem>>, %arg10: memref<1x32xf32, #tpu.memory_space<vmem>>, %arg11: memref<32x32xf32, #tpu.memory_space<vmem>>, %arg12: memref<1x32xf32, #tpu.memory_space<vmem>>, %arg13: memref<32x64xf32, #tpu.memory_space<vmem>>, %arg14: memref<1x64xf32, #tpu.memory_space<vmem>>, %arg15: memref<8x16xf32, #tpu.memory_space<vmem>>, %arg16: memref<1x16xf32, #tpu.memory_space<vmem>>, %arg17: memref<16x64xf32, #tpu.memory_space<vmem>>, %arg18: memref<8x128xf32, #tpu.memory_space<vmem>>, %arg19: memref<8x24xf32, #tpu.memory_space<vmem>>) attributes {dimension_semantics = [#tpu.dimension_semantics<parallel>], iteration_bounds = array<i64: 4>, scalar_prefetch = 0 : i64, scratch_operands = 0 : i64, tpu.core_type = #tpu.core_type<tc>, window_params = [{transform_indices = @transform_0, window_bounds = array<i64: 8, 64>}, {transform_indices = @transform_1, window_bounds = array<i64: 8, 8>}, {pipeline_mode = #tpu.pipeline_mode<synchronous>, transform_indices = @transform_2, window_bounds = array<i64: 64, 32>}, {pipeline_mode = #tpu.pipeline_mode<synchronous>, transform_indices = @transform_3, window_bounds = array<i64: 1, 32>}, {pipeline_mode = #tpu.pipeline_mode<synchronous>, transform_indices = @transform_4, window_bounds = array<i64: 32, 32>}, {pipeline_mode = #tpu.pipeline_mode<synchronous>, transform_indices = @transform_5, window_bounds = array<i64: 1, 32>}, {pipeline_mode = #tpu.pipeline_mode<synchronous>, transform_indices = @transform_6, window_bounds = array<i64: 32, 16>}, {pipeline_mode = #tpu.pipeline_mode<synchronous>, transform_indices = @transform_7, window_bounds = array<i64: 1, 16>}, {pipeline_mode = #tpu.pipeline_mode<synchronous>, transform_indices = @transform_8, window_bounds = array<i64: 8, 32>}, {pipeline_mode = #tpu.pipeline_mode<synchronous>, transform_indices = @transform_9, window_bounds = array<i64: 1, 32>}, {pipeline_mode = #tpu.pipeline_mode<synchronous>, transform_indices = @transform_10, window_bounds = array<i64: 32, 32>}, {pipeline_mode = #tpu.pipeline_mode<synchronous>, transform_indices = @transform_11, window_bounds = array<i64: 1, 32>}, {pipeline_mode = #tpu.pipeline_mode<synchronous>, transform_indices = @transform_12, window_bounds = array<i64: 32, 64>}, {pipeline_mode = #tpu.pipeline_mode<synchronous>, transform_indices = @transform_13, window_bounds = array<i64: 1, 64>}, {pipeline_mode = #tpu.pipeline_mode<synchronous>, transform_indices = @transform_14, window_bounds = array<i64: 8, 16>}, {pipeline_mode = #tpu.pipeline_mode<synchronous>, transform_indices = @transform_15, window_bounds = array<i64: 1, 16>}, {pipeline_mode = #tpu.pipeline_mode<synchronous>, transform_indices = @transform_16, window_bounds = array<i64: 16, 64>}, {transform_indices = @transform_17, window_bounds = array<i64: 8, 128>}, {transform_indices = @transform_18, window_bounds = array<i64: 8, 24>}]} {
    %c0 = arith.constant 0 : index
    %c0_0 = arith.constant 0 : index
    %0 = vector.load %arg1[%c0, %c0_0] : memref<8x64xf32, #tpu.memory_space<vmem>>, vector<8x64xf32>
    %c0_1 = arith.constant 0 : index
    %c0_2 = arith.constant 0 : index
    %1 = vector.load %arg3[%c0_1, %c0_2] : memref<64x32xf32, #tpu.memory_space<vmem>>, vector<64x32xf32>
    %cst = arith.constant dense<0.000000e+00> : vector<8x32xf32>
    %2 = tpu.matmul %0, %1, %cst {dimension_numbers = #tpu.dot_dimension_numbers<[1], [0], [0], [1], [0, 0, 1, 1], [], []>} : vector<8x64xf32>, vector<64x32xf32>, vector<8x32xf32> -> vector<8x32xf32>
    %c0_3 = arith.constant 0 : index
    %c0_4 = arith.constant 0 : index
    %3 = vector.load %arg4[%c0_3, %c0_4] : memref<1x32xf32, #tpu.memory_space<vmem>>, vector<1x32xf32>
    %4 = vector.broadcast %3 : vector<1x32xf32> to vector<8x32xf32>
    %5 = arith.addf %2, %4 : vector<8x32xf32>
    %6 = math.tanh %5 : vector<8x32xf32>
    %c0_5 = arith.constant 0 : index
    %c0_6 = arith.constant 0 : index
    %7 = vector.load %arg5[%c0_5, %c0_6] : memref<32x32xf32, #tpu.memory_space<vmem>>, vector<32x32xf32>
    %cst_7 = arith.constant dense<0.000000e+00> : vector<8x32xf32>
    %8 = tpu.matmul %6, %7, %cst_7 {dimension_numbers = #tpu.dot_dimension_numbers<[1], [0], [0], [1], [0, 0, 1, 1], [], []>} : vector<8x32xf32>, vector<32x32xf32>, vector<8x32xf32> -> vector<8x32xf32>
    %c0_8 = arith.constant 0 : index
    %c0_9 = arith.constant 0 : index
    %9 = vector.load %arg6[%c0_8, %c0_9] : memref<1x32xf32, #tpu.memory_space<vmem>>, vector<1x32xf32>
    %10 = vector.broadcast %9 : vector<1x32xf32> to vector<8x32xf32>
    %11 = arith.addf %8, %10 : vector<8x32xf32>
    %12 = math.tanh %11 : vector<8x32xf32>
    %c0_10 = arith.constant 0 : index
    %c0_11 = arith.constant 0 : index
    %13 = vector.load %arg7[%c0_10, %c0_11] : memref<32x16xf32, #tpu.memory_space<vmem>>, vector<32x16xf32>
    %cst_12 = arith.constant dense<0.000000e+00> : vector<8x16xf32>
    %14 = tpu.matmul %12, %13, %cst_12 {dimension_numbers = #tpu.dot_dimension_numbers<[1], [0], [0], [1], [0, 0, 1, 1], [], []>} : vector<8x32xf32>, vector<32x16xf32>, vector<8x16xf32> -> vector<8x16xf32>
    %c0_13 = arith.constant 0 : index
    %c0_14 = arith.constant 0 : index
    %15 = vector.load %arg8[%c0_13, %c0_14] : memref<1x16xf32, #tpu.memory_space<vmem>>, vector<1x16xf32>
    %16 = vector.broadcast %15 : vector<1x16xf32> to vector<8x16xf32>
    %17 = arith.addf %14, %16 : vector<8x16xf32>
    %18 = vector.extract_strided_slice %17 {offsets = [0, 0], sizes = [8, 8], strides = [1, 1]} : vector<8x16xf32> to vector<8x8xf32>
    %19 = vector.extract_strided_slice %17 {offsets = [0, 8], sizes = [8, 8], strides = [1, 1]} : vector<8x16xf32> to vector<8x8xf32>
    %cst_15 = arith.constant 0.000000e+00 : f32
    %20 = vector.broadcast %cst_15 : f32 to vector<8x8xf32>
    %21 = arith.maximumf %19, %20 : vector<8x8xf32>
    %22 = math.absf %19 : vector<8x8xf32>
    %cst_16 = arith.constant 0.000000e+00 : f32
    %23 = vector.broadcast %cst_16 : f32 to vector<8x8xf32>
    %24 = arith.subf %23, %22 : vector<8x8xf32>
    %25 = math.exp %24 : vector<8x8xf32>
    %26 = math.log1p %25 : vector<8x8xf32>
    %27 = arith.addf %21, %26 : vector<8x8xf32>
    %cst_17 = arith.constant 9.99999974E-5 : f32
    %cst_18 = arith.constant 5.000000e+00 : f32
    %28 = vector.broadcast %cst_17 : f32 to vector<8x8xf32>
    %29 = arith.maximumf %28, %27 : vector<8x8xf32>
    %30 = vector.broadcast %cst_18 : f32 to vector<8x8xf32>
    %31 = arith.minimumf %30, %29 : vector<8x8xf32>
    %c0_19 = arith.constant 0 : index
    %c0_20 = arith.constant 0 : index
    %32 = vector.load %arg2[%c0_19, %c0_20] : memref<8x8xf32, #tpu.memory_space<vmem>>, vector<8x8xf32>
    %33 = math.sqrt %31 : vector<8x8xf32>
    %34 = arith.mulf %32, %33 : vector<8x8xf32>
    %35 = arith.addf %18, %34 : vector<8x8xf32>
    %c0_21 = arith.constant 0 : index
    %c0_22 = arith.constant 0 : index
    %36 = vector.load %arg9[%c0_21, %c0_22] : memref<8x32xf32, #tpu.memory_space<vmem>>, vector<8x32xf32>
    %cst_23 = arith.constant dense<0.000000e+00> : vector<8x32xf32>
    %37 = tpu.matmul %35, %36, %cst_23 {dimension_numbers = #tpu.dot_dimension_numbers<[1], [0], [0], [1], [0, 0, 1, 1], [], []>} : vector<8x8xf32>, vector<8x32xf32>, vector<8x32xf32> -> vector<8x32xf32>
    %c0_24 = arith.constant 0 : index
    %c0_25 = arith.constant 0 : index
    %38 = vector.load %arg10[%c0_24, %c0_25] : memref<1x32xf32, #tpu.memory_space<vmem>>, vector<1x32xf32>
    %39 = vector.broadcast %38 : vector<1x32xf32> to vector<8x32xf32>
    %40 = arith.addf %37, %39 : vector<8x32xf32>
    %41 = math.tanh %40 : vector<8x32xf32>
    %c0_26 = arith.constant 0 : index
    %c0_27 = arith.constant 0 : index
    %42 = vector.load %arg11[%c0_26, %c0_27] : memref<32x32xf32, #tpu.memory_space<vmem>>, vector<32x32xf32>
    %cst_28 = arith.constant dense<0.000000e+00> : vector<8x32xf32>
    %43 = tpu.matmul %41, %42, %cst_28 {dimension_numbers = #tpu.dot_dimension_numbers<[1], [0], [0], [1], [0, 0, 1, 1], [], []>} : vector<8x32xf32>, vector<32x32xf32>, vector<8x32xf32> -> vector<8x32xf32>
    %c0_29 = arith.constant 0 : index
    %c0_30 = arith.constant 0 : index
    %44 = vector.load %arg12[%c0_29, %c0_30] : memref<1x32xf32, #tpu.memory_space<vmem>>, vector<1x32xf32>
    %45 = vector.broadcast %44 : vector<1x32xf32> to vector<8x32xf32>
    %46 = arith.addf %43, %45 : vector<8x32xf32>
    %47 = math.tanh %46 : vector<8x32xf32>
    %c0_31 = arith.constant 0 : index
    %c0_32 = arith.constant 0 : index
    %48 = vector.load %arg13[%c0_31, %c0_32] : memref<32x64xf32, #tpu.memory_space<vmem>>, vector<32x64xf32>
    %cst_33 = arith.constant dense<0.000000e+00> : vector<8x64xf32>
    %49 = tpu.matmul %47, %48, %cst_33 {dimension_numbers = #tpu.dot_dimension_numbers<[1], [0], [0], [1], [0, 0, 1, 1], [], []>} : vector<8x32xf32>, vector<32x64xf32>, vector<8x64xf32> -> vector<8x64xf32>
    %c0_34 = arith.constant 0 : index
    %c0_35 = arith.constant 0 : index
    %50 = vector.load %arg14[%c0_34, %c0_35] : memref<1x64xf32, #tpu.memory_space<vmem>>, vector<1x64xf32>
    %51 = vector.broadcast %50 : vector<1x64xf32> to vector<8x64xf32>
    %52 = arith.addf %49, %51 : vector<8x64xf32>
    %53 = arith.negf %52 : vector<8x64xf32>
    %54 = math.exp %53 : vector<8x64xf32>
    %cst_36 = arith.constant 1.000000e+00 : f32
    %55 = vector.broadcast %cst_36 : f32 to vector<8x64xf32>
    %56 = arith.addf %55, %54 : vector<8x64xf32>
    %57 = arith.divf %55, %56 : vector<8x64xf32>
    %58 = arith.mulf %35, %35 : vector<8x8xf32>
    %cst_37 = arith.constant dense<0.000000e+00> : vector<8xf32>
    %59 = vector.multi_reduction <add>, %58, %cst_37 [1] : vector<8x8xf32> to vector<8xf32>
    %60 = vector.shape_cast %59 : vector<8xf32> to vector<8x1xf32>
    %c0_38 = arith.constant 0 : index
    %c0_39 = arith.constant 0 : index
    %61 = vector.load %arg15[%c0_38, %c0_39] : memref<8x16xf32, #tpu.memory_space<vmem>>, vector<8x16xf32>
    %cst_40 = arith.constant dense<0.000000e+00> : vector<8x16xf32>
    %62 = tpu.matmul %35, %61, %cst_40 {dimension_numbers = #tpu.dot_dimension_numbers<[1], [0], [0], [1], [0, 0, 1, 1], [], []>} : vector<8x8xf32>, vector<8x16xf32>, vector<8x16xf32> -> vector<8x16xf32>
    %c0_41 = arith.constant 0 : index
    %c0_42 = arith.constant 0 : index
    %63 = vector.load %arg16[%c0_41, %c0_42] : memref<1x16xf32, #tpu.memory_space<vmem>>, vector<1x16xf32>
    %64 = vector.broadcast %60 : vector<8x1xf32> to vector<8x16xf32>
    %65 = vector.broadcast %63 : vector<1x16xf32> to vector<8x16xf32>
    %66 = arith.addf %64, %65 : vector<8x16xf32>
    %cst_43 = arith.constant 2.000000e+00 : f32
    %67 = vector.broadcast %cst_43 : f32 to vector<8x16xf32>
    %68 = arith.mulf %67, %62 : vector<8x16xf32>
    %69 = arith.subf %66, %68 : vector<8x16xf32>
    %cst_44 = arith.constant 0.000000e+00 : f32
    %70 = vector.broadcast %cst_44 : f32 to vector<8x16xf32>
    %71 = arith.maximumf %69, %70 : vector<8x16xf32>
    %cst_45 = arith.constant -2.000000e+00 : f32
    %72 = vector.broadcast %cst_45 : f32 to vector<8x16xf32>
    %73 = arith.mulf %72, %71 : vector<8x16xf32>
    %74 = math.exp %73 : vector<8x16xf32>
    %c0_46 = arith.constant 0 : index
    %c0_47 = arith.constant 0 : index
    %75 = vector.load %arg17[%c0_46, %c0_47] : memref<16x64xf32, #tpu.memory_space<vmem>>, vector<16x64xf32>
    %cst_48 = arith.constant dense<0.000000e+00> : vector<8x64xf32>
    %76 = tpu.matmul %74, %75, %cst_48 {dimension_numbers = #tpu.dot_dimension_numbers<[1], [0], [0], [1], [0, 0, 1, 1], [], []>} : vector<8x16xf32>, vector<16x64xf32>, vector<8x64xf32> -> vector<8x64xf32>
    %cst_49 = arith.constant 9.99999997E-7 : f32
    %77 = vector.broadcast %cst_49 : f32 to vector<8x64xf32>
    %78 = arith.addf %76, %77 : vector<8x64xf32>
    %79 = tpu.reciprocal %78 : vector<8x64xf32> -> vector<8x64xf32>
    %80 = tpu.concatenate %57, %79 in 1 : vector<8x64xf32>, vector<8x64xf32> -> vector<8x128xf32>
    %c0_50 = arith.constant 0 : index
    %c0_51 = arith.constant 0 : index
    %81 = vector.load %arg18[%c0_50, %c0_51] : memref<8x128xf32, #tpu.memory_space<vmem>>, vector<8x128xf32>
    tpu.vector_store %arg18[%c0_50, %c0_51], %80 {strides = array<i32>} : memref<8x128xf32, #tpu.memory_space<vmem>>, vector<8x128xf32>,
    %82 = tpu.concatenate %35, %18, %31 in 1 : vector<8x8xf32>, vector<8x8xf32>, vector<8x8xf32> -> vector<8x24xf32>
    %c0_52 = arith.constant 0 : index
    %c0_53 = arith.constant 0 : index
    %83 = vector.load %arg19[%c0_52, %c0_53] : memref<8x24xf32, #tpu.memory_space<vmem>>, vector<8x24xf32>
    tpu.vector_store %arg19[%c0_52, %c0_53], %82 {strides = array<i32>} : memref<8x24xf32, #tpu.memory_space<vmem>>, vector<8x24xf32>,
    return
  }
  func.func @transform_0(%arg0: i32) -> (i32, i32) {
    %c0_i32 = arith.constant 0 : i32
    %c0_i32_0 = arith.constant 0 : i32
    return %arg0, %c0_i32 : i32, i32
  }
  func.func @transform_1(%arg0: i32) -> (i32, i32) {
    %c0_i32 = arith.constant 0 : i32
    %c0_i32_0 = arith.constant 0 : i32
    return %arg0, %c0_i32 : i32, i32
  }
  func.func @transform_2(%arg0: i32) -> (i32, i32) {
    %c0_i32 = arith.constant 0 : i32
    %c0_i32_0 = arith.constant 0 : i32
    %c0_i32_1 = arith.constant 0 : i32
    return %c0_i32, %c0_i32_0 : i32, i32
  }
  func.func @transform_3(%arg0: i32) -> (i32, i32) {
    %c0_i32 = arith.constant 0 : i32
    %c0_i32_0 = arith.constant 0 : i32
    %c0_i32_1 = arith.constant 0 : i32
    return %c0_i32, %c0_i32_0 : i32, i32
  }
  func.func @transform_4(%arg0: i32) -> (i32, i32) {
    %c0_i32 = arith.constant 0 : i32
    %c0_i32_0 = arith.constant 0 : i32
    %c0_i32_1 = arith.constant 0 : i32
    return %c0_i32, %c0_i32_0 : i32, i32
  }
  func.func @transform_5(%arg0: i32) -> (i32, i32) {
    %c0_i32 = arith.constant 0 : i32
    %c0_i32_0 = arith.constant 0 : i32
    %c0_i32_1 = arith.constant 0 : i32
    return %c0_i32, %c0_i32_0 : i32, i32
  }
  func.func @transform_6(%arg0: i32) -> (i32, i32) {
    %c0_i32 = arith.constant 0 : i32
    %c0_i32_0 = arith.constant 0 : i32
    %c0_i32_1 = arith.constant 0 : i32
    return %c0_i32, %c0_i32_0 : i32, i32
  }
  func.func @transform_7(%arg0: i32) -> (i32, i32) {
    %c0_i32 = arith.constant 0 : i32
    %c0_i32_0 = arith.constant 0 : i32
    %c0_i32_1 = arith.constant 0 : i32
    return %c0_i32, %c0_i32_0 : i32, i32
  }
  func.func @transform_8(%arg0: i32) -> (i32, i32) {
    %c0_i32 = arith.constant 0 : i32
    %c0_i32_0 = arith.constant 0 : i32
    %c0_i32_1 = arith.constant 0 : i32
    return %c0_i32, %c0_i32_0 : i32, i32
  }
  func.func @transform_9(%arg0: i32) -> (i32, i32) {
    %c0_i32 = arith.constant 0 : i32
    %c0_i32_0 = arith.constant 0 : i32
    %c0_i32_1 = arith.constant 0 : i32
    return %c0_i32, %c0_i32_0 : i32, i32
  }
  func.func @transform_10(%arg0: i32) -> (i32, i32) {
    %c0_i32 = arith.constant 0 : i32
    %c0_i32_0 = arith.constant 0 : i32
    %c0_i32_1 = arith.constant 0 : i32
    return %c0_i32, %c0_i32_0 : i32, i32
  }
  func.func @transform_11(%arg0: i32) -> (i32, i32) {
    %c0_i32 = arith.constant 0 : i32
    %c0_i32_0 = arith.constant 0 : i32
    %c0_i32_1 = arith.constant 0 : i32
    return %c0_i32, %c0_i32_0 : i32, i32
  }
  func.func @transform_12(%arg0: i32) -> (i32, i32) {
    %c0_i32 = arith.constant 0 : i32
    %c0_i32_0 = arith.constant 0 : i32
    %c0_i32_1 = arith.constant 0 : i32
    return %c0_i32, %c0_i32_0 : i32, i32
  }
  func.func @transform_13(%arg0: i32) -> (i32, i32) {
    %c0_i32 = arith.constant 0 : i32
    %c0_i32_0 = arith.constant 0 : i32
    %c0_i32_1 = arith.constant 0 : i32
    return %c0_i32, %c0_i32_0 : i32, i32
  }
  func.func @transform_14(%arg0: i32) -> (i32, i32) {
    %c0_i32 = arith.constant 0 : i32
    %c0_i32_0 = arith.constant 0 : i32
    %c0_i32_1 = arith.constant 0 : i32
    return %c0_i32, %c0_i32_0 : i32, i32
  }
  func.func @transform_15(%arg0: i32) -> (i32, i32) {
    %c0_i32 = arith.constant 0 : i32
    %c0_i32_0 = arith.constant 0 : i32
    %c0_i32_1 = arith.constant 0 : i32
    return %c0_i32, %c0_i32_0 : i32, i32
  }
  func.func @transform_16(%arg0: i32) -> (i32, i32) {
    %c0_i32 = arith.constant 0 : i32
    %c0_i32_0 = arith.constant 0 : i32
    %c0_i32_1 = arith.constant 0 : i32
    return %c0_i32, %c0_i32_0 : i32, i32
  }
  func.func @transform_17(%arg0: i32) -> (i32, i32) {
    %c0_i32 = arith.constant 0 : i32
    %c0_i32_0 = arith.constant 0 : i32
    return %arg0, %c0_i32 : i32, i32
  }
  func.func @transform_18(%arg0: i32) -> (i32, i32) {
    %c0_i32 = arith.constant 0 : i32
    %c0_i32_0 = arith.constant 0 : i32
    return %arg0, %c0_i32 : i32, i32
  }
}

</mosaic_0001>

<llo_original>
// kernel: tpu_custom_call.1
$region0: #{tpu_custom_call.1}
  #allocation0 [shape = 'u32[]', space=smem, size = 0x4, offset = 0x4, fixed_abs, tag = 'smem constant byte address 0x4 - core index']
  #allocation1 [shape = 'u32[144,128]{1,0:T(1,128)}', space=vmem, size = 0x12000, scoped, tag = 'internal scratch']
  %s0 = inlined_call_operand.vmem [shape: f32[32,64], index: 0, kind: input, shape index: {}]
  %s1 = inlined_call_operand.vmem [shape: f32[32,8], index: 1, kind: input, shape index: {}]
  %s2 = inlined_call_operand.vmem [shape: f32[64,32], index: 2, kind: input, shape index: {}]
  %s3 = inlined_call_operand.vmem [shape: f32[1,32], index: 3, kind: input, shape index: {}]
  %s4 = inlined_call_operand.vmem [shape: f32[32,32], index: 4, kind: input, shape index: {}]
  %s5 = inlined_call_operand.vmem [shape: f32[1,32], index: 5, kind: input, shape index: {}]
  %s6 = inlined_call_operand.vmem [shape: f32[32,16], index: 6, kind: input, shape index: {}]
  %s7 = inlined_call_operand.hbm [shape: f32[1,16], index: 7, kind: input, shape index: {}]
  %s8 = inlined_call_operand.vmem [shape: f32[8,32], index: 8, kind: input, shape index: {}]
  %s9 = inlined_call_operand.vmem [shape: f32[1,32], index: 9, kind: input, shape index: {}]
  %s10 = inlined_call_operand.vmem [shape: f32[32,32], index: 10, kind: input, shape index: {}]
  %s11 = inlined_call_operand.vmem [shape: f32[1,32], index: 11, kind: input, shape index: {}]
  %s12 = inlined_call_operand.vmem [shape: f32[32,64], index: 12, kind: input, shape index: {}]
  %s13 = inlined_call_operand.vmem [shape: f32[1,64], index: 13, kind: input, shape index: {}]
  %s14 = inlined_call_operand.vmem [shape: f32[8,16], index: 14, kind: input, shape index: {}]
  %s15 = inlined_call_operand.vmem [shape: f32[1,16], index: 15, kind: input, shape index: {}]
  %s16 = inlined_call_operand.vmem [shape: f32[16,64], index: 16, kind: input, shape index: {}]
  %s17 = inlined_call_operand.hbm [shape: f32[32,128], index: 17, kind: output, shape index: {0}]
  %s18 = inlined_call_operand.vmem [shape: f32[32,24], index: 18, kind: output, shape index: {1}]
  %19 = xla_tuple %s17, %s18
  %s20 = sld [smem:[#allocation0]]
  $region113: #{tpu_custom_call.1} parent=0
    _
  %s22 = ssub.s32 1, %s20
  %s23 = scalar_select 0, %s22, %s20
  $region1: #{tpu_custom_call.1} parent=0
    #allocation2 [shape = 'u8[512]{0}', space=vmem, size = 0x400, scoped, tag = 'input window, operand 7, single buffered']
    #allocation3 [shape = 's32[2]{0}', space=sflag, size = 0x8, scoped, tag = 'scoped memory for tpu_custom_call.1']
    #allocation4 [shape = 's32[2]{0}', space=sflag, size = 0x8, scoped, tag = 'scoped memory for tpu_custom_call.1']
    #allocation5 [shape = 'u8[8192]{0}', space=vmem, size = 0x2000, scoped, tag = 'output window, operand 0']
    %24 = vsyncpa [#allocation3], 0
    %25 = vsyncpa [#allocation4], 0
    %s26 = scalar_lea.sflag [#allocation4], 1
    %27 = vsyncpa %s26, 0
    loop: start=0, step=1, limit=6
    $region2: #{tpu_custom_call.1} parent=1 // loop_pre_header
      _
    $region3: #{tpu_custom_call.1} parent=1 // loop_header
      %s29 = sphi 0, %s33
      %p30 = scmp.ge.s32.totalorder %s29, 6
      %s39 = sphi 0, %s41
      %s42 = sphi 0, %s39
      %s43 = sphi 0, %s42
      %s59 = sphi 0, %s43
      %s65 = sphi 0, %s67
      %s68 = sphi 0, %s65
      %s69 = sphi 0, %s68
      %s85 = sphi 0, %s69
      %s89 = sphi 0, %s89
      %s91 = sphi 0, %s89
      %s92 = sphi 0, %s91
      %s106 = sphi 0, %s92
      %s110 = sphi 0, %s110
      %s112 = sphi 0, %s110
      %s113 = sphi 0, %s112
      %s127 = sphi 0, %s113
      %s131 = sphi 0, %s131
      %s133 = sphi 0, %s131
      %s134 = sphi 0, %s133
      %s148 = sphi 0, %s134
      %s152 = sphi 0, %s152
      %s154 = sphi 0, %s152
      %s155 = sphi 0, %s154
      %s169 = sphi 0, %s155
      %s173 = sphi 0, %s173
      %s175 = sphi 0, %s173
      %s176 = sphi 0, %s175
      %s190 = sphi 0, %s176
      %s194 = sphi 0, %s194
      %s196 = sphi 0, %s194
      %s197 = sphi 0, %s196
      %s211 = sphi 0, %s197
      %s215 = sphi 0, %s215
      %s217 = sphi 0, %s215
      %s218 = sphi 0, %s217
      %s232 = sphi 0, %s218
      %s236 = sphi 0, %s236
      %s238 = sphi 0, %s236
      %s239 = sphi 0, %s238
      %s253 = sphi 0, %s239
      %s257 = sphi 0, %s257
      %s259 = sphi 0, %s257
      %s260 = sphi 0, %s259
      %s274 = sphi 0, %s260
      %s278 = sphi 0, %s278
      %s280 = sphi 0, %s278
      %s281 = sphi 0, %s280
      %s295 = sphi 0, %s281
      %s299 = sphi 0, %s299
      %s301 = sphi 0, %s299
      %s302 = sphi 0, %s301
      %s316 = sphi 0, %s302
      %s320 = sphi 0, %s320
      %s322 = sphi 0, %s320
      %s323 = sphi 0, %s322
      %s337 = sphi 0, %s323
      %s341 = sphi 0, %s341
      %s343 = sphi 0, %s341
      %s344 = sphi 0, %s343
      %s358 = sphi 0, %s344
      %s362 = sphi 0, %s362
      %s364 = sphi 0, %s362
      %s365 = sphi 0, %s364
      %s379 = sphi 0, %s365
      %s383 = sphi 0, %s383
      %s385 = sphi 0, %s383
      %s386 = sphi 0, %s385
      %s400 = sphi 0, %s386
      %s406 = sphi 0, %s408
      %s409 = sphi 0, %s406
      %s410 = sphi 0, %s409
      %s426 = sphi 0, %s410
      %s432 = sphi 0, %s434
      %s435 = sphi 0, %s432
      %s436 = sphi 0, %s435
      %s452 = sphi 0, %s436
    $region4: #{tpu_custom_call.1} parent=1 // loop_header_branch
      %32 = sbr.rel (%p30) target = $region8
    $region5: #{tpu_custom_call.1} parent=1 // loop_body
      %s34 = ssub.s32 %s29, 1
      %s35 = ssub.s32 %s29, 2
      %s36 = sadd.s32 %s29, 1
      %s37 = ssub.s32 %s29, %s36
      %p38 = scmp.eq.s32.totalorder %s37, 0
      %s40 = sadd.s32 %s39, 1
      %s41 = scalar_select %p38, %s39, %s40
      %p44 = pneg %p38
      %p45 = scmp.eq.s32.totalorder %s29, 3
      %p46 = por %p44, %p45
      %p47 = scmp.ne.s32.totalorder %s39, %s42
      %p48 = scmp.eq.s32.totalorder %s29, 0
      %p49 = por %p47, %p48
      %p50 = scmp.ne.s32.totalorder %s39, %s42
      %p51 = scmp.eq.s32.totalorder %s34, 3
      %p52 = por %p50, %p51
      %p53 = scmp.ne.s32.totalorder %s42, %s43
      %p54 = scmp.eq.s32.totalorder %s34, 0
      %p55 = por %p53, %p54
      %p56 = scmp.ne.s32.totalorder %s42, %s43
      %p57 = scmp.eq.s32.totalorder %s35, 3
      %p58 = por %p56, %p57
      %p60 = scmp.ne.s32.totalorder %s43, %s59
      %p61 = scmp.eq.s32.totalorder %s35, 0
      %p62 = por %p60, %p61
      %s63 = ssub.s32 %s29, %s36
      %p64 = scmp.eq.s32.totalorder %s63, 0
      %s66 = sadd.s32 %s65, 1
      %s67 = scalar_select %p64, %s65, %s66
      %p70 = pneg %p64
      %p71 = scmp.eq.s32.totalorder %s29, 3
      %p72 = por %p70, %p71
      %p73 = scmp.ne.s32.totalorder %s65, %s68
      %p74 = scmp.eq.s32.totalorder %s29, 0
      %p75 = por %p73, %p74
      %p76 = scmp.ne.s32.totalorder %s65, %s68
      %p77 = scmp.eq.s32.totalorder %s34, 3
      %p78 = por %p76, %p77
      %p79 = scmp.ne.s32.totalorder %s68, %s69
      %p80 = scmp.eq.s32.totalorder %s34, 0
      %p81 = por %p79, %p80
      %p82 = scmp.ne.s32.totalorder %s68, %s69
      %p83 = scmp.eq.s32.totalorder %s35, 3
      %p84 = por %p82, %p83
      %p86 = scmp.ne.s32.totalorder %s69, %s85
      %p87 = scmp.eq.s32.totalorder %s35, 0
      %p88 = por %p86, %p87
      %s90 = sadd.s32 %s89, 1
      %p93 = scmp.eq.s32.totalorder %s29, 3
      %p94 = scmp.ne.s32.totalorder %s89, %s91
      %p95 = scmp.eq.s32.totalorder %s29, 0
      %p96 = por %p94, %p95
      %p97 = scmp.ne.s32.totalorder %s89, %s91
      %p98 = scmp.eq.s32.totalorder %s34, 3
      %p99 = por %p97, %p98
      %p100 = scmp.ne.s32.totalorder %s91, %s92
      %p101 = scmp.eq.s32.totalorder %s34, 0
      %p102 = por %p100, %p101
      %p103 = scmp.ne.s32.totalorder %s91, %s92
      %p104 = scmp.eq.s32.totalorder %s35, 3
      %p105 = por %p103, %p104
      %p107 = scmp.ne.s32.totalorder %s92, %s106
      %p108 = scmp.eq.s32.totalorder %s35, 0
      %p109 = por %p107, %p108
      %s111 = sadd.s32 %s110, 1
      %p114 = scmp.eq.s32.totalorder %s29, 3
      %p115 = scmp.ne.s32.totalorder %s110, %s112
      %p116 = scmp.eq.s32.totalorder %s29, 0
      %p117 = por %p115, %p116
      %p118 = scmp.ne.s32.totalorder %s110, %s112
      %p119 = scmp.eq.s32.totalorder %s34, 3
      %p120 = por %p118, %p119
      %p121 = scmp.ne.s32.totalorder %s112, %s113
      %p122 = scmp.eq.s32.totalorder %s34, 0
      %p123 = por %p121, %p122
      %p124 = scmp.ne.s32.totalorder %s112, %s113
      %p125 = scmp.eq.s32.totalorder %s35, 3
      %p126 = por %p124, %p125
      %p128 = scmp.ne.s32.totalorder %s113, %s127
      %p129 = scmp.eq.s32.totalorder %s35, 0
      %p130 = por %p128, %p129
      %s132 = sadd.s32 %s131, 1
      %p135 = scmp.eq.s32.totalorder %s29, 3
      %p136 = scmp.ne.s32.totalorder %s131, %s133
      %p137 = scmp.eq.s32.totalorder %s29, 0
      %p138 = por %p136, %p137
      %p139 = scmp.ne.s32.totalorder %s131, %s133
      %p140 = scmp.eq.s32.totalorder %s34, 3
      %p141 = por %p139, %p140
      %p142 = scmp.ne.s32.totalorder %s133, %s134
      %p143 = scmp.eq.s32.totalorder %s34, 0
      %p144 = por %p142, %p143
      %p145 = scmp.ne.s32.totalorder %s133, %s134
      %p146 = scmp.eq.s32.totalorder %s35, 3
      %p147 = por %p145, %p146
      %p149 = scmp.ne.s32.totalorder %s134, %s148
      %p150 = scmp.eq.s32.totalorder %s35, 0
      %p151 = por %p149, %p150
      %s153 = sadd.s32 %s152, 1
      %p156 = scmp.eq.s32.totalorder %s29, 3
      %p157 = scmp.ne.s32.totalorder %s152, %s154
      %p158 = scmp.eq.s32.totalorder %s29, 0
      %p159 = por %p157, %p158
      %p160 = scmp.ne.s32.totalorder %s152, %s154
      %p161 = scmp.eq.s32.totalorder %s34, 3
      %p162 = por %p160, %p161
      %p163 = scmp.ne.s32.totalorder %s154, %s155
      %p164 = scmp.eq.s32.totalorder %s34, 0
      %p165 = por %p163, %p164
      %p166 = scmp.ne.s32.totalorder %s154, %s155
      %p167 = scmp.eq.s32.totalorder %s35, 3
      %p168 = por %p166, %p167
      %p170 = scmp.ne.s32.totalorder %s155, %s169
      %p171 = scmp.eq.s32.totalorder %s35, 0
      %p172 = por %p170, %p171
      %s174 = sadd.s32 %s173, 1
      %p177 = scmp.eq.s32.totalorder %s29, 3
      %p178 = scmp.ne.s32.totalorder %s173, %s175
      %p179 = scmp.eq.s32.totalorder %s29, 0
      %p180 = por %p178, %p179
      %p181 = scmp.ne.s32.totalorder %s173, %s175
      %p182 = scmp.eq.s32.totalorder %s34, 3
      %p183 = por %p181, %p182
      %p184 = scmp.ne.s32.totalorder %s175, %s176
      %p185 = scmp.eq.s32.totalorder %s34, 0
      %p186 = por %p184, %p185
      %p187 = scmp.ne.s32.totalorder %s175, %s176
      %p188 = scmp.eq.s32.totalorder %s35, 3
      %p189 = por %p187, %p188
      %p191 = scmp.ne.s32.totalorder %s176, %s190
      %p192 = scmp.eq.s32.totalorder %s35, 0
      %p193 = por %p191, %p192
      %s195 = sadd.s32 %s194, 1
      %p198 = scmp.eq.s32.totalorder %s29, 3
      %p199 = scmp.ne.s32.totalorder %s194, %s196
      %p200 = scmp.eq.s32.totalorder %s29, 0
      %p201 = por %p199, %p200
      %p202 = scmp.ne.s32.totalorder %s194, %s196
      %p203 = scmp.eq.s32.totalorder %s34, 3
      %p204 = por %p202, %p203
      %p205 = scmp.ne.s32.totalorder %s196, %s197
      %p206 = scmp.eq.s32.totalorder %s34, 0
      %p207 = por %p205, %p206
      %p208 = scmp.ne.s32.totalorder %s196, %s197
      %p209 = scmp.eq.s32.totalorder %s35, 3
      %p210 = por %p208, %p209
      %p212 = scmp.ne.s32.totalorder %s197, %s211
      %p213 = scmp.eq.s32.totalorder %s35, 0
      %p214 = por %p212, %p213
      %s216 = sadd.s32 %s215, 1
      %p219 = scmp.eq.s32.totalorder %s29, 3
      %p220 = scmp.ne.s32.totalorder %s215, %s217
      %p221 = scmp.eq.s32.totalorder %s29, 0
      %p222 = por %p220, %p221
      %p223 = scmp.ne.s32.totalorder %s215, %s217
      %p224 = scmp.eq.s32.totalorder %s34, 3
      %p225 = por %p223, %p224
      %p226 = scmp.ne.s32.totalorder %s217, %s218
      %p227 = scmp.eq.s32.totalorder %s34, 0
      %p228 = por %p226, %p227
      %p229 = scmp.ne.s32.totalorder %s217, %s218
      %p230 = scmp.eq.s32.totalorder %s35, 3
      %p231 = por %p229, %p230
      %p233 = scmp.ne.s32.totalorder %s218, %s232
      %p234 = scmp.eq.s32.totalorder %s35, 0
      %p235 = por %p233, %p234
      %s237 = sadd.s32 %s236, 1
      %p240 = scmp.eq.s32.totalorder %s29, 3
      %p241 = scmp.ne.s32.totalorder %s236, %s238
      %p242 = scmp.eq.s32.totalorder %s29, 0
      %p243 = por %p241, %p242
      %p244 = scmp.ne.s32.totalorder %s236, %s238
      %p245 = scmp.eq.s32.totalorder %s34, 3
      %p246 = por %p244, %p245
      %p247 = scmp.ne.s32.totalorder %s238, %s239
      %p248 = scmp.eq.s32.totalorder %s34, 0
      %p249 = por %p247, %p248
      %p250 = scmp.ne.s32.totalorder %s238, %s239
      %p251 = scmp.eq.s32.totalorder %s35, 3
      %p252 = por %p250, %p251
      %p254 = scmp.ne.s32.totalorder %s239, %s253
      %p255 = scmp.eq.s32.totalorder %s35, 0
      %p256 = por %p254, %p255
      %s258 = sadd.s32 %s257, 1
      %p261 = scmp.eq.s32.totalorder %s29, 3
      %p262 = scmp.ne.s32.totalorder %s257, %s259
      %p263 = scmp.eq.s32.totalorder %s29, 0
      %p264 = por %p262, %p263
      %p265 = scmp.ne.s32.totalorder %s257, %s259
      %p266 = scmp.eq.s32.totalorder %s34, 3
      %p267 = por %p265, %p266
      %p268 = scmp.ne.s32.totalorder %s259, %s260
      %p269 = scmp.eq.s32.totalorder %s34, 0
      %p270 = por %p268, %p269
      %p271 = scmp.ne.s32.totalorder %s259, %s260
      %p272 = scmp.eq.s32.totalorder %s35, 3
      %p273 = por %p271, %p272
      %p275 = scmp.ne.s32.totalorder %s260, %s274
      %p276 = scmp.eq.s32.totalorder %s35, 0
      %p277 = por %p275, %p276
      %s279 = sadd.s32 %s278, 1
      %p282 = scmp.eq.s32.totalorder %s29, 3
      %p283 = scmp.ne.s32.totalorder %s278, %s280
      %p284 = scmp.eq.s32.totalorder %s29, 0
      %p285 = por %p283, %p284
      %p286 = scmp.ne.s32.totalorder %s278, %s280
      %p287 = scmp.eq.s32.totalorder %s34, 3
      %p288 = por %p286, %p287
      %p289 = scmp.ne.s32.totalorder %s280, %s281
      %p290 = scmp.eq.s32.totalorder %s34, 0
      %p291 = por %p289, %p290
      %p292 = scmp.ne.s32.totalorder %s280, %s281
      %p293 = scmp.eq.s32.totalorder %s35, 3
      %p294 = por %p292, %p293
      %p296 = scmp.ne.s32.totalorder %s281, %s295
      %p297 = scmp.eq.s32.totalorder %s35, 0
      %p298 = por %p296, %p297
      %s300 = sadd.s32 %s299, 1
      %p303 = scmp.eq.s32.totalorder %s29, 3
      %p304 = scmp.ne.s32.totalorder %s299, %s301
      %p305 = scmp.eq.s32.totalorder %s29, 0
      %p306 = por %p304, %p305
      %p307 = scmp.ne.s32.totalorder %s299, %s301
      %p308 = scmp.eq.s32.totalorder %s34, 3
      %p309 = por %p307, %p308
      %p310 = scmp.ne.s32.totalorder %s301, %s302
      %p311 = scmp.eq.s32.totalorder %s34, 0
      %p312 = por %p310, %p311
      %p313 = scmp.ne.s32.totalorder %s301, %s302
      %p314 = scmp.eq.s32.totalorder %s35, 3
      %p315 = por %p313, %p314
      %p317 = scmp.ne.s32.totalorder %s302, %s316
      %p318 = scmp.eq.s32.totalorder %s35, 0
      %p319 = por %p317, %p318
      %s321 = sadd.s32 %s320, 1
      %p324 = scmp.eq.s32.totalorder %s29, 3
      %p325 = scmp.ne.s32.totalorder %s320, %s322
      %p326 = scmp.eq.s32.totalorder %s29, 0
      %p327 = por %p325, %p326
      %p328 = scmp.ne.s32.totalorder %s320, %s322
      %p329 = scmp.eq.s32.totalorder %s34, 3
      %p330 = por %p328, %p329
      %p331 = scmp.ne.s32.totalorder %s322, %s323
      %p332 = scmp.eq.s32.totalorder %s34, 0
      %p333 = por %p331, %p332
      %p334 = scmp.ne.s32.totalorder %s322, %s323
      %p335 = scmp.eq.s32.totalorder %s35, 3
      %p336 = por %p334, %p335
      %p338 = scmp.ne.s32.totalorder %s323, %s337
      %p339 = scmp.eq.s32.totalorder %s35, 0
      %p340 = por %p338, %p339
      %s342 = sadd.s32 %s341, 1
      %p345 = scmp.eq.s32.totalorder %s29, 3
      %p346 = scmp.ne.s32.totalorder %s341, %s343
      %p347 = scmp.eq.s32.totalorder %s29, 0
      %p348 = por %p346, %p347
      %p349 = scmp.ne.s32.totalorder %s341, %s343
      %p350 = scmp.eq.s32.totalorder %s34, 3
      %p351 = por %p349, %p350
      %p352 = scmp.ne.s32.totalorder %s343, %s344
      %p353 = scmp.eq.s32.totalorder %s34, 0
      %p354 = por %p352, %p353
      %p355 = scmp.ne.s32.totalorder %s343, %s344
      %p356 = scmp.eq.s32.totalorder %s35, 3
      %p357 = por %p355, %p356
      %p359 = scmp.ne.s32.totalorder %s344, %s358
      %p360 = scmp.eq.s32.totalorder %s35, 0
      %p361 = por %p359, %p360
      %s363 = sadd.s32 %s362, 1
      %p366 = scmp.eq.s32.totalorder %s29, 3
      %p367 = scmp.ne.s32.totalorder %s362, %s364
      %p368 = scmp.eq.s32.totalorder %s29, 0
      %p369 = por %p367, %p368
      %p370 = scmp.ne.s32.totalorder %s362, %s364
      %p371 = scmp.eq.s32.totalorder %s34, 3
      %p372 = por %p370, %p371
      %p373 = scmp.ne.s32.totalorder %s364, %s365
      %p374 = scmp.eq.s32.totalorder %s34, 0
      %p375 = por %p373, %p374
      %p376 = scmp.ne.s32.totalorder %s364, %s365
      %p377 = scmp.eq.s32.totalorder %s35, 3
      %p378 = por %p376, %p377
      %p380 = scmp.ne.s32.totalorder %s365, %s379
      %p381 = scmp.eq.s32.totalorder %s35, 0
      %p382 = por %p380, %p381
      %s384 = sadd.s32 %s383, 1
      %p387 = scmp.eq.s32.totalorder %s29, 3
      %p388 = scmp.ne.s32.totalorder %s383, %s385
      %p389 = scmp.eq.s32.totalorder %s29, 0
      %p390 = por %p388, %p389
      %p391 = scmp.ne.s32.totalorder %s383, %s385
      %p392 = scmp.eq.s32.totalorder %s34, 3
      %p393 = por %p391, %p392
      %p394 = scmp.ne.s32.totalorder %s385, %s386
      %p395 = scmp.eq.s32.totalorder %s34, 0
      %p396 = por %p394, %p395
      %p397 = scmp.ne.s32.totalorder %s385, %s386
      %p398 = scmp.eq.s32.totalorder %s35, 3
      %p399 = por %p397, %p398
      %p401 = scmp.ne.s32.totalorder %s386, %s400
      %p402 = scmp.eq.s32.totalorder %s35, 0
      %p403 = por %p401, %p402
      %s404 = ssub.s32 %s29, %s36
      %p405 = scmp.eq.s32.totalorder %s404, 0
      %s407 = sadd.s32 %s406, 1
      %s408 = scalar_select %p405, %s406, %s407
      %p411 = pneg %p405
      %p412 = scmp.eq.s32.totalorder %s29, 3
      %p413 = por %p411, %p412
      %p414 = scmp.ne.s32.totalorder %s406, %s409
      %p415 = scmp.eq.s32.totalorder %s29, 0
      %p416 = por %p414, %p415
      %p417 = scmp.ne.s32.totalorder %s406, %s409
      %p418 = scmp.eq.s32.totalorder %s34, 3
      %p419 = por %p417, %p418
      %p420 = scmp.ne.s32.totalorder %s409, %s410
      %p421 = scmp.eq.s32.totalorder %s34, 0
      %p422 = por %p420, %p421
      %p423 = scmp.ne.s32.totalorder %s409, %s410
      %p424 = scmp.eq.s32.totalorder %s35, 3
      %p425 = por %p423, %p424
      %p427 = scmp.ne.s32.totalorder %s410, %s426
      %p428 = scmp.eq.s32.totalorder %s35, 0
      %p429 = por %p427, %p428
      %s430 = ssub.s32 %s29, %s36
      %p431 = scmp.eq.s32.totalorder %s430, 0
      %s433 = sadd.s32 %s432, 1
      %s434 = scalar_select %p431, %s432, %s433
      %p437 = pneg %p431
      %p438 = scmp.eq.s32.totalorder %s29, 3
      %p439 = por %p437, %p438
      %p440 = scmp.ne.s32.totalorder %s432, %s435
      %p441 = scmp.eq.s32.totalorder %s29, 0
      %p442 = por %p440, %p441
      %p443 = scmp.ne.s32.totalorder %s432, %s435
      %p444 = scmp.eq.s32.totalorder %s34, 3
      %p445 = por %p443, %p444
      %p446 = scmp.ne.s32.totalorder %s435, %s436
      %p447 = scmp.eq.s32.totalorder %s34, 0
      %p448 = por %p446, %p447
      %p449 = scmp.ne.s32.totalorder %s435, %s436
      %p450 = scmp.eq.s32.totalorder %s35, 3
      %p451 = por %p449, %p450
      %p453 = scmp.ne.s32.totalorder %s436, %s452
      %p454 = scmp.eq.s32.totalorder %s35, 0
      %p455 = por %p453, %p454
      %p456 = scmp.le.s32.totalorder 1, %s29
      %p457 = scmp.lt.s32.totalorder %s29, 5
      %p458 = pnand %p456, %p457
      %p459 = pneg %p458
      // Predicated region
      $region9: #{tpu_custom_call.1} parent=5 // pred_check
        _
      $region10: #{tpu_custom_call.1} parent=5 // pred_check_branch
        %461 = sbr.rel (%p458) target = $region12
      $region11: #{tpu_custom_call.1} parent=5 // pred_region
        %s462 = ssub.s32 %s29, 1
        // Predicated region
        $region13: #{tpu_custom_call.1} parent=11 // pred_check
          %p463 = pneg %p102
        $region14: #{tpu_custom_call.1} parent=11 // pred_check_branch
          %465 = sbr.rel (%p463) target = $region16
        $region15: #{tpu_custom_call.1} parent=11 // pred_region
          _
        $region16: #{tpu_custom_call.1} parent=11 // pred_fallthru
          _
        // Predicated region
        $region17: #{tpu_custom_call.1} parent=11 // pred_check
          %p466 = pneg %p123
        $region18: #{tpu_custom_call.1} parent=11 // pred_check_branch
          %468 = sbr.rel (%p466) target = $region20
        $region19: #{tpu_custom_call.1} parent=11 // pred_region
          _
        $region20: #{tpu_custom_call.1} parent=11 // pred_fallthru
          _
        // Predicated region
        $region21: #{tpu_custom_call.1} parent=11 // pred_check
          %p469 = pneg %p144
        $region22: #{tpu_custom_call.1} parent=11 // pred_check_branch
          %471 = sbr.rel (%p469) target = $region24
        $region23: #{tpu_custom_call.1} parent=11 // pred_region
          _
        $region24: #{tpu_custom_call.1} parent=11 // pred_fallthru
          _
        // Predicated region
        $region25: #{tpu_custom_call.1} parent=11 // pred_check
          %p472 = pneg %p165
        $region26: #{tpu_custom_call.1} parent=11 // pred_check_branch
          %474 = sbr.rel (%p472) target = $region28
        $region27: #{tpu_custom_call.1} parent=11 // pred_region
          _
        $region28: #{tpu_custom_call.1} parent=11 // pred_fallthru
          _
        // Predicated region
        $region29: #{tpu_custom_call.1} parent=11 // pred_check
          %p475 = pneg %p186
        $region30: #{tpu_custom_call.1} parent=11 // pred_check_branch
          %477 = sbr.rel (%p475) target = $region32
        $region31: #{tpu_custom_call.1} parent=11 // pred_region
          _
        $region32: #{tpu_custom_call.1} parent=11 // pred_fallthru
          _
        // Predicated region
        $region33: #{tpu_custom_call.1} parent=11 // pred_check
          %p478 = pneg %p207
        $region34: #{tpu_custom_call.1} parent=11 // pred_check_branch
          %480 = sbr.rel (%p478) target = $region36
        $region35: #{tpu_custom_call.1} parent=11 // pred_region
          %s482 = ssub.s32 16, 16
          %483 = vsyncadd [#allocation3], %s482
          %s485 = sshll.u32 [#allocation2], 4
          %s486 = int_to_ptr.vmem [resolvable:$true] %s485
          %488 = dma.hbm_to_vmem [thread:$0]  %s7, 16, %s486, [#allocation3]
        $region36: #{tpu_custom_call.1} parent=11 // pred_fallthru
          _
        // Predicated region
        $region37: #{tpu_custom_call.1} parent=11 // pred_check
          %p489 = pneg %p228
        $region38: #{tpu_custom_call.1} parent=11 // pred_check_branch
          %491 = sbr.rel (%p489) target = $region40
        $region39: #{tpu_custom_call.1} parent=11 // pred_region
          _
        $region40: #{tpu_custom_call.1} parent=11 // pred_fallthru
          _
        // Predicated region
        $region41: #{tpu_custom_call.1} parent=11 // pred_check
          %p492 = pneg %p249
        $region42: #{tpu_custom_call.1} parent=11 // pred_check_branch
          %494 = sbr.rel (%p492) target = $region44
        $region43: #{tpu_custom_call.1} parent=11 // pred_region
          _
        $region44: #{tpu_custom_call.1} parent=11 // pred_fallthru
          _
        // Predicated region
        $region45: #{tpu_custom_call.1} parent=11 // pred_check
          %p495 = pneg %p270
        $region46: #{tpu_custom_call.1} parent=11 // pred_check_branch
          %497 = sbr.rel (%p495) target = $region48
        $region47: #{tpu_custom_call.1} parent=11 // pred_region
          _
        $region48: #{tpu_custom_call.1} parent=11 // pred_fallthru
          _
        // Predicated region
        $region49: #{tpu_custom_call.1} parent=11 // pred_check
          %p498 = pneg %p291
        $region50: #{tpu_custom_call.1} parent=11 // pred_check_branch
          %500 = sbr.rel (%p498) target = $region52
        $region51: #{tpu_custom_call.1} parent=11 // pred_region
          _
        $region52: #{tpu_custom_call.1} parent=11 // pred_fallthru
          _
        // Predicated region
        $region53: #{tpu_custom_call.1} parent=11 // pred_check
          %p501 = pneg %p312
        $region54: #{tpu_custom_call.1} parent=11 // pred_check_branch
          %503 = sbr.rel (%p501) target = $region56
        $region55: #{tpu_custom_call.1} parent=11 // pred_region
          _
        $region56: #{tpu_custom_call.1} parent=11 // pred_fallthru
          _
        // Predicated region
        $region57: #{tpu_custom_call.1} parent=11 // pred_check
          %p504 = pneg %p333
        $region58: #{tpu_custom_call.1} parent=11 // pred_check_branch
          %506 = sbr.rel (%p504) target = $region60
        $region59: #{tpu_custom_call.1} parent=11 // pred_region
          _
        $region60: #{tpu_custom_call.1} parent=11 // pred_fallthru
          _
        // Predicated region
        $region61: #{tpu_custom_call.1} parent=11 // pred_check
          %p507 = pneg %p354
        $region62: #{tpu_custom_call.1} parent=11 // pred_check_branch
          %509 = sbr.rel (%p507) target = $region64
        $region63: #{tpu_custom_call.1} parent=11 // pred_region
          _
        $region64: #{tpu_custom_call.1} parent=11 // pred_fallthru
          _
        // Predicated region
        $region65: #{tpu_custom_call.1} parent=11 // pred_check
          %p510 = pneg %p375
        $region66: #{tpu_custom_call.1} parent=11 // pred_check_branch
          %512 = sbr.rel (%p510) target = $region68
        $region67: #{tpu_custom_call.1} parent=11 // pred_region
          _
        $region68: #{tpu_custom_call.1} parent=11 // pred_fallthru
          _
        // Predicated region
        $region69: #{tpu_custom_call.1} parent=11 // pred_check
          %p513 = pneg %p396
        $region70: #{tpu_custom_call.1} parent=11 // pred_check_branch
          %515 = sbr.rel (%p513) target = $region72
        $region71: #{tpu_custom_call.1} parent=11 // pred_region
          _
        $region72: #{tpu_custom_call.1} parent=11 // pred_fallthru
          _
      $region12: #{tpu_custom_call.1} parent=5 // pred_fallthru
        _
      %p516 = scmp.lt.s32.totalorder %s29, 4
      // Predicated region
      $region73: #{tpu_custom_call.1} parent=5 // pred_check
        %p517 = pneg %p516
      $region74: #{tpu_custom_call.1} parent=5 // pred_check_branch
        %519 = sbr.rel (%p517) target = $region76
      $region75: #{tpu_custom_call.1} parent=5 // pred_region
        // Predicated region
        $region77: #{tpu_custom_call.1} parent=75 // pred_check
          %p520 = pneg %p49
        $region78: #{tpu_custom_call.1} parent=75 // pred_check_branch
          %522 = sbr.rel (%p520) target = $region80
        $region79: #{tpu_custom_call.1} parent=75 // pred_region
          %p523 = scmp.lt.s32.totalorder %s29, 3
          %s524 = scalar_select %p523, %s29, 3
          %s525 = smul.addr %s524, 8
          %s526 = scalar_lea.vmem %s0, %s525
        $region80: #{tpu_custom_call.1} parent=75 // pred_fallthru
          _
        // Predicated region
        $region81: #{tpu_custom_call.1} parent=75 // pred_check
          %p527 = pneg %p75
        $region82: #{tpu_custom_call.1} parent=75 // pred_check_branch
          %529 = sbr.rel (%p527) target = $region84
        $region83: #{tpu_custom_call.1} parent=75 // pred_region
          %p530 = scmp.lt.s32.totalorder %s29, 3
          %s531 = scalar_select %p530, %s29, 3
          %s532 = smul.addr %s531, 8
          %s533 = scalar_lea.vmem %s1, %s532
        $region84: #{tpu_custom_call.1} parent=75 // pred_fallthru
          _
      $region76: #{tpu_custom_call.1} parent=5 // pred_fallthru
        _
      %p534 = scmp.le.s32.totalorder 1, %s29
      %p535 = scmp.lt.s32.totalorder %s29, 5
      %p536 = pnand %p534, %p535
      %p537 = pneg %p536
      // Predicated region
      $region85: #{tpu_custom_call.1} parent=5 // pred_check
        _
      $region86: #{tpu_custom_call.1} parent=5 // pred_check_branch
        %539 = sbr.rel (%p536) target = $region88
      $region87: #{tpu_custom_call.1} parent=5 // pred_region
        %s540 = ssub.s32 %s29, 1
        // Predicated region
        $region89: #{tpu_custom_call.1} parent=87 // pred_check
          %p541 = pneg %p207
        $region90: #{tpu_custom_call.1} parent=87 // pred_check_branch
          %543 = sbr.rel (%p541) target = $region92
        $region91: #{tpu_custom_call.1} parent=87 // pred_region
          %544 = dma.done [#allocation3], 16
        $region92: #{tpu_custom_call.1} parent=87 // pred_fallthru
          _
        %p545 = scmp.lt.s32.totalorder %s34, 3
        %s546 = scalar_select %p545, %s34, 3
        %s547 = smul.addr %s546, 8
        %s548 = scalar_lea.vmem %s0, %s547
        %p549 = pneg %p55
        %p550 = pneg %p52
        %p551 = scmp.lt.s32.totalorder %s34, 3
        %s552 = scalar_select %p551, %s34, 3
        %s553 = smul.addr %s552, 8
        %s554 = scalar_lea.vmem %s1, %s553
        %p555 = pneg %p81
        %p556 = pneg %p78
        %p557 = pneg %p102
        %p558 = pneg %p99
        %p559 = pneg %p123
        %p560 = pneg %p120
        %p561 = pneg %p144
        %p562 = pneg %p141
        %p563 = pneg %p165
        %p564 = pneg %p162
        %p565 = pneg %p186
        %p566 = pneg %p183
        %p567 = pneg %p207
        %p568 = pneg %p204
        %p569 = pneg %p228
        %p570 = pneg %p225
        %p571 = pneg %p249
        %p572 = pneg %p246
        %p573 = pneg %p270
        %p574 = pneg %p267
        %p575 = pneg %p291
        %p576 = pneg %p288
        %p577 = pneg %p312
        %p578 = pneg %p309
        %p579 = pneg %p333
        %p580 = pneg %p330
        %p581 = pneg %p354
        %p582 = pneg %p351
        %p583 = pneg %p375
        %p584 = pneg %p372
        %p585 = pneg %p396
        %p586 = pneg %p393
        %p587 = pneg %p422
        %p588 = pneg %p419
        %s589 = sand.u32 %s409, 1
        %s590 = scalar_lea.sflag [#allocation4], %s589
        %s591 = sand.u32 %s409, 1
        %s592 = smul.addr %s591, 8
        %s593 = scalar_lea.vmem [#allocation5], %s592
        %p594 = pneg %p448
        %p595 = pneg %p445
        %p596 = scmp.lt.s32.totalorder %s34, 3
        %s597 = scalar_select %p596, %s34, 3
        %s598 = smul.addr %s597, 8
        %s599 = scalar_lea.vmem %s18, %s598
        %p600 = scmp.lt.s32.totalorder %s34, 3
        %s601 = scalar_select %p600, %s34, 3
        %s602 = smul.addr %s601, 8
        %s603 = scalar_lea.vmem %s0, %s602
        %p604 = scmp.lt.s32.totalorder %s34, 3
        %s605 = scalar_select %p604, %s34, 3
        %s606 = smul.addr %s605, 8
        %s607 = scalar_lea.vmem %s1, %s606
        %p608 = scmp.lt.s32.totalorder %s34, 3
        %s609 = scalar_select %p608, %s34, 3
        %s610 = smul.addr %s609, 8
        %s611 = scalar_lea.vmem %s18, %s610
        %v612 = vld [vmem:[%s603] sm:$0xff]
        %v613 = vld [vmem:[%s2] sm:$0xff]
        %v614 = vld [vmem:[%s2 + $0x8] sm:$0xff]
        %v615 = vld [vmem:[%s2 + $0x10] sm:$0xff]
        %v616 = vld [vmem:[%s2 + $0x18] sm:$0xff]
        %v617 = vld [vmem:[%s2 + $0x20] sm:$0xff]
        %v618 = vld [vmem:[%s2 + $0x28] sm:$0xff]
        %v619 = vld [vmem:[%s2 + $0x30] sm:$0xff]
        %v620 = vld [vmem:[%s2 + $0x38] sm:$0xff]
        %v621 = vld [vmem:[%s3] sm:$0x1]
        %v623 = vlaneseq
        %v624 = vshrl.u32 %v623, 7
        %v625 = vsub.s32 0, %v624
        %v626 = vrot.slane %v621, %v625
        %vm628 = vcmask 523264
        %v630 = vsel %vm628, %v612, 0
        %632 = vmatprep.subr.mxu0 0.0
        %633 = vmatpush1.msra.mxu0 %v613
        %634 = vmatprep.subr.mxu0 0.0
        %635 = vmatpush1.msra.mxu0 %v614
        %636 = vmatprep.subr.mxu0 0.0
        %637 = vmatpush1.msra.mxu0 %v615
        %638 = vmatprep.subr.mxu0 0.0
        %639 = vmatpush1.msra.mxu0 %v616
        %640 = vmatprep.subr.mxu0 0.0
        %641 = vmatpush1.msra.mxu0 %v617
        %642 = vmatprep.subr.mxu0 0.0
        %643 = vmatpush1.msra.mxu0 %v618
        %644 = vmatprep.subr.mxu0 0.0
        %645 = vmatpush1.msra.mxu0 %v619
        %646 = vmatprep.subr.mxu0 0.0
        %647 = vmatpush1.msra.mxu0 %v620
        %648 = vmatprep.subr.mxu0 0.0
        %649 = vmatpush1.msra.mxu0 0.0
        %650 = vmatprep.subr.mxu0 0.0
        %651 = vmatpush1.msra.mxu0 0.0
        %652 = vmatprep.subr.mxu0 0.0
        %653 = vmatpush1.msra.mxu0 0.0
        %654 = vmatprep.subr.mxu0 0.0
        %655 = vmatpush1.msra.mxu0 0.0
        %656 = vmatprep.subr.mxu0 0.0
        %657 = vmatpush1.msra.mxu0 0.0
        %658 = vmatprep.subr.mxu0 0.0
        %659 = vmatpush1.msra.mxu0 0.0
        %660 = vmatprep.subr.mxu0 0.0
        %661 = vmatpush1.msra.mxu0 0.0
        %662 = vmatprep.subr.mxu0 0.0
        %663 = vmatpush1.msra.mxu0 0.0
        %664 = vmatprep.subr.mxu0 0.0
        %665 = vmatpush1.msra.mxu0 0.0
        %666 = vmatprep.subr.mxu0 0.0
        %667 = vmatpush1.msra.mxu0 0.0
        %668 = vmatprep.subr.mxu0 0.0
        %669 = vmatpush1.msra.mxu0 0.0
        %670 = vmatprep.subr.mxu0 0.0
        %671 = vmatpush1.msra.mxu0 0.0
        %672 = vmatprep.subr.mxu0 0.0
        %673 = vmatpush1.msra.mxu0 0.0
        %674 = vmatprep.subr.mxu0 0.0
        %675 = vmatpush1.msra.mxu0 0.0
        %676 = vmatprep.subr.mxu0 0.0
        %677 = vmatpush1.msra.mxu0 0.0
        %678 = vmatprep.subr.mxu0 0.0
        %679 = vmatpush1.msra.mxu0 0.0
        %680 = vmatprep.subr.mxu0 0.0
        %681 = vmatpush1.msra.mxu0 0.0
        %682 = vmatprep.subr.mxu0 0.0
        %683 = vmatpush1.msra.mxu0 0.0
        %684 = vmatprep.subr.mxu0 0.0
        %685 = vmatpush1.msra.mxu0 0.0
        %686 = vmatprep.subr.mxu0 0.0
        %687 = vmatpush1.msra.mxu0 0.0
        %688 = vmatprep.subr.mxu0 0.0
        %689 = vmatpush1.msra.mxu0 0.0
        %690 = vmatprep.subr.mxu0 0.0
        %691 = vmatpush1.msra.mxu0 0.0
        %692 = vmatprep.subr.mxu0 0.0
        %693 = vmatpush1.msra.mxu0 0.0
        %694 = vmatprep.subr.mxu0 0.0
        %695 = vmatpush1.msra.mxu0 0.0
        %696 = vmatprep.mubr.f32.mxu0 0.0
        %697 = vmatmul.mubr.f32.gmra.mrb[0].mxu0 %v630
        %v698 = vpop.f32.mrb[0].mxu0
        %v699 = vadd.f32 %v626, %v698
        %v700 = vpop.f32.mrb[0].mxu0
        %701 = vdwg.mxu0
        %v702 = vtanh.pop %v699
        %v703 = vld [vmem:[%s4] sm:$0xff]
        %v704 = vld [vmem:[%s4 + $0x8] sm:$0xff]
        %v705 = vld [vmem:[%s4 + $0x10] sm:$0xff]
        %v706 = vld [vmem:[%s4 + $0x18] sm:$0xff]
        %v707 = vld [vmem:[%s5] sm:$0x1]
        %v709 = vlaneseq
        %v710 = vshrl.u32 %v709, 7
        %v711 = vsub.s32 0, %v710
        %v712 = vrot.slane %v707, %v711
        %vm714 = vcmask 261120
        %v716 = vsel %vm714, %v702, 0
        %718 = vmatprep.subr.mxu0 0.0
        %719 = vmatpush1.msra.mxu0 %v703
        %720 = vmatprep.subr.mxu0 0.0
        %721 = vmatpush1.msra.mxu0 %v704
        %722 = vmatprep.subr.mxu0 0.0
        %723 = vmatpush1.msra.mxu0 %v705
        %724 = vmatprep.subr.mxu0 0.0
        %725 = vmatpush1.msra.mxu0 %v706
        %726 = vmatprep.subr.mxu0 0.0
        %727 = vmatpush1.msra.mxu0 0.0
        %728 = vmatprep.subr.mxu0 0.0
        %729 = vmatpush1.msra.mxu0 0.0
        %730 = vmatprep.subr.mxu0 0.0
        %731 = vmatpush1.msra.mxu0 0.0
        %732 = vmatprep.subr.mxu0 0.0
        %733 = vmatpush1.msra.mxu0 0.0
        %734 = vmatprep.subr.mxu0 0.0
        %735 = vmatpush1.msra.mxu0 0.0
        %736 = vmatprep.subr.mxu0 0.0
        %737 = vmatpush1.msra.mxu0 0.0
        %738 = vmatprep.subr.mxu0 0.0
        %739 = vmatpush1.msra.mxu0 0.0
        %740 = vmatprep.subr.mxu0 0.0
        %741 = vmatpush1.msra.mxu0 0.0
        %742 = vmatprep.subr.mxu0 0.0
        %743 = vmatpush1.msra.mxu0 0.0
        %744 = vmatprep.subr.mxu0 0.0
        %745 = vmatpush1.msra.mxu0 0.0
        %746 = vmatprep.subr.mxu0 0.0
        %747 = vmatpush1.msra.mxu0 0.0
        %748 = vmatprep.subr.mxu0 0.0
        %749 = vmatpush1.msra.mxu0 0.0
        %750 = vmatprep.subr.mxu0 0.0
        %751 = vmatpush1.msra.mxu0 0.0
        %752 = vmatprep.subr.mxu0 0.0
        %753 = vmatpush1.msra.mxu0 0.0
        %754 = vmatprep.subr.mxu0 0.0
        %755 = vmatpush1.msra.mxu0 0.0
        %756 = vmatprep.subr.mxu0 0.0
        %757 = vmatpush1.msra.mxu0 0.0
        %758 = vmatprep.subr.mxu0 0.0
        %759 = vmatpush1.msra.mxu0 0.0
        %760 = vmatprep.subr.mxu0 0.0
        %761 = vmatpush1.msra.mxu0 0.0
        %762 = vmatprep.subr.mxu0 0.0
        %763 = vmatpush1.msra.mxu0 0.0
        %764 = vmatprep.subr.mxu0 0.0
        %765 = vmatpush1.msra.mxu0 0.0
        %766 = vmatprep.subr.mxu0 0.0
        %767 = vmatpush1.msra.mxu0 0.0
        %768 = vmatprep.subr.mxu0 0.0
        %769 = vmatpush1.msra.mxu0 0.0
        %770 = vmatprep.subr.mxu0 0.0
        %771 = vmatpush1.msra.mxu0 0.0
        %772 = vmatprep.subr.mxu0 0.0
        %773 = vmatpush1.msra.mxu0 0.0
        %774 = vmatprep.subr.mxu0 0.0
        %775 = vmatpush1.msra.mxu0 0.0
        %776 = vmatprep.subr.mxu0 0.0
        %777 = vmatpush1.msra.mxu0 0.0
        %778 = vmatprep.subr.mxu0 0.0
        %779 = vmatpush1.msra.mxu0 0.0
        %780 = vmatprep.subr.mxu0 0.0
        %781 = vmatpush1.msra.mxu0 0.0
        %782 = vmatprep.mubr.f32.mxu0 0.0
        %783 = vmatmul.mubr.f32.gmra.mrb[0].mxu0 %v716
        %v784 = vpop.f32.mrb[0].mxu0
        %v785 = vadd.f32 %v712, %v784
        %v786 = vpop.f32.mrb[0].mxu0
        %787 = vdwg.mxu0
        %v788 = vtanh.pop %v785
        %v789 = vld [vmem:[%s6] sm:$0xff]
        %v790 = vld [vmem:[%s6 + $0x8] sm:$0xff]
        %v791 = vld [vmem:[%s6 + $0x10] sm:$0xff]
        %v792 = vld [vmem:[%s6 + $0x18] sm:$0xff]
        %v793 = vld [vmem:[#allocation2] sm:$0x1]
        %v795 = vlaneseq
        %v796 = vshrl.u32 %v795, 7
        %v797 = vsub.s32 0, %v796
        %v798 = vrot.slane %v793, %v797
        %v801 = vsel %vm714, %v788, 0
        %803 = vmatprep.subr.mxu0 0.0
        %804 = vmatpush1.msra.mxu0 %v789
        %805 = vmatprep.subr.mxu0 0.0
        %806 = vmatpush1.msra.mxu0 %v790
        %807 = vmatprep.subr.mxu0 0.0
        %808 = vmatpush1.msra.mxu0 %v791
        %809 = vmatprep.subr.mxu0 0.0
        %810 = vmatpush1.msra.mxu0 %v792
        %811 = vmatprep.subr.mxu0 0.0
        %812 = vmatpush1.msra.mxu0 0.0
        %813 = vmatprep.subr.mxu0 0.0
        %814 = vmatpush1.msra.mxu0 0.0
        %815 = vmatprep.subr.mxu0 0.0
        %816 = vmatpush1.msra.mxu0 0.0
        %817 = vmatprep.subr.mxu0 0.0
        %818 = vmatpush1.msra.mxu0 0.0
        %819 = vmatprep.subr.mxu0 0.0
        %820 = vmatpush1.msra.mxu0 0.0
        %821 = vmatprep.subr.mxu0 0.0
        %822 = vmatpush1.msra.mxu0 0.0
        %823 = vmatprep.subr.mxu0 0.0
        %824 = vmatpush1.msra.mxu0 0.0
        %825 = vmatprep.subr.mxu0 0.0
        %826 = vmatpush1.msra.mxu0 0.0
        %827 = vmatprep.subr.mxu0 0.0
        %828 = vmatpush1.msra.mxu0 0.0
        %829 = vmatprep.subr.mxu0 0.0
        %830 = vmatpush1.msra.mxu0 0.0
        %831 = vmatprep.subr.mxu0 0.0
        %832 = vmatpush1.msra.mxu0 0.0
        %833 = vmatprep.subr.mxu0 0.0
        %834 = vmatpush1.msra.mxu0 0.0
        %835 = vmatprep.subr.mxu0 0.0
        %836 = vmatpush1.msra.mxu0 0.0
        %837 = vmatprep.subr.mxu0 0.0
        %838 = vmatpush1.msra.mxu0 0.0
        %839 = vmatprep.subr.mxu0 0.0
        %840 = vmatpush1.msra.mxu0 0.0
        %841 = vmatprep.subr.mxu0 0.0
        %842 = vmatpush1.msra.mxu0 0.0
        %843 = vmatprep.subr.mxu0 0.0
        %844 = vmatpush1.msra.mxu0 0.0
        %845 = vmatprep.subr.mxu0 0.0
        %846 = vmatpush1.msra.mxu0 0.0
        %847 = vmatprep.subr.mxu0 0.0
        %848 = vmatpush1.msra.mxu0 0.0
        %849 = vmatprep.subr.mxu0 0.0
        %850 = vmatpush1.msra.mxu0 0.0
        %851 = vmatprep.subr.mxu0 0.0
        %852 = vmatpush1.msra.mxu0 0.0
        %853 = vmatprep.subr.mxu0 0.0
        %854 = vmatpush1.msra.mxu0 0.0
        %855 = vmatprep.subr.mxu0 0.0
        %856 = vmatpush1.msra.mxu0 0.0
        %857 = vmatprep.subr.mxu0 0.0
        %858 = vmatpush1.msra.mxu0 0.0
        %859 = vmatprep.subr.mxu0 0.0
        %860 = vmatpush1.msra.mxu0 0.0
        %861 = vmatprep.subr.mxu0 0.0
        %862 = vmatpush1.msra.mxu0 0.0
        %863 = vmatprep.subr.mxu0 0.0
        %864 = vmatpush1.msra.mxu0 0.0
        %865 = vmatprep.subr.mxu0 0.0
        %866 = vmatpush1.msra.mxu0 0.0
        %867 = vmatprep.mubr.f32.mxu0 0.0
        %868 = vmatmul.mubr.f32.gmra.mrb[0].mxu0 %v801
        %v869 = vpop.f32.mrb[0].mxu0
        %v870 = vadd.f32 %v798, %v869
        %v871 = vpop.f32.mrb[0].mxu0
        %872 = vdwg.mxu0
        %v873 = vmax.f32 %v870, 0.0
        %v874 = vand.u32 2147483647, %v870
        %v875 = vsub.f32 0.0, %v874
        %v876 = vmul.f32 %v875, 1.442695
        %v877 = vpow.pop %v876
        %v878 = vadd.f32 %v877, 1.0
        %v879 = vlog2.pop %v878
        %v880 = vmul.f32 %v879, 0.6931472
        %v881 = vmul.f32 -0.5, %v877
        %v882 = vadd.f32 %v881, 1.0
        %v883 = vmul.f32 %v882, %v877
        %v884 = vand.u32 2147483647, %v877
        %vm885 = vcmp.lt.f32.partialorder %v884, 0.0004427343
        %v886 = vsel %vm885, %v883, %v880
        %v887 = vadd.f32 %v873, %v886
        %v888 = vmax.f32 %v887, 0.0001
        %v889 = vmin.f32 %v888, 5.0
        %v890 = vld [vmem:[%s607] sm:$0xff]
        %v891 = vrsqrt.pop %v889
        %v892 = vmul.f32 %v889, %v891
        %vm893 = vcmp.eq.f32.partialorder %v889, inf
        %v894 = vsel %vm893, %v889, %v892
        %vm895 = vcmp.eq.f32.partialorder %v889, 0.0
        %v896 = vand.u32 %v889, 2147483648
        %v897 = vsel %vm895, %v896, %v894
        %899 = vrot.lane.b32.xlu0 %v897, 120
        %v900 = vpop.permute.xlu0 %899
        %v902 = vmul.f32 %v890, %v900
        %v903 = vadd.f32 %v870, %v902
        %v904 = vld [vmem:[%s8] sm:$0xff]
        %v905 = vld [vmem:[%s9] sm:$0x1]
        %v907 = vlaneseq
        %v908 = vshrl.u32 %v907, 7
        %v909 = vsub.s32 0, %v908
        %v910 = vrot.slane %v905, %v909
        %vm912 = vcmask 64512
        %v914 = vsel %vm912, %v903, 0
        %916 = vmatprep.subr.mxu0 0.0
        %917 = vmatpush1.msra.mxu0 %v904
        %918 = vmatprep.subr.mxu0 0.0
        %919 = vmatpush1.msra.mxu0 0.0
        %920 = vmatprep.subr.mxu0 0.0
        %921 = vmatpush1.msra.mxu0 0.0
        %922 = vmatprep.subr.mxu0 0.0
        %923 = vmatpush1.msra.mxu0 0.0
        %924 = vmatprep.subr.mxu0 0.0
        %925 = vmatpush1.msra.mxu0 0.0
        %926 = vmatprep.subr.mxu0 0.0
        %927 = vmatpush1.msra.mxu0 0.0
        %928 = vmatprep.subr.mxu0 0.0
        %929 = vmatpush1.msra.mxu0 0.0
        %930 = vmatprep.subr.mxu0 0.0
        %931 = vmatpush1.msra.mxu0 0.0
        %932 = vmatprep.subr.mxu0 0.0
        %933 = vmatpush1.msra.mxu0 0.0
        %934 = vmatprep.subr.mxu0 0.0
        %935 = vmatpush1.msra.mxu0 0.0
        %936 = vmatprep.subr.mxu0 0.0
        %937 = vmatpush1.msra.mxu0 0.0
        %938 = vmatprep.subr.mxu0 0.0
        %939 = vmatpush1.msra.mxu0 0.0
        %940 = vmatprep.subr.mxu0 0.0
        %941 = vmatpush1.msra.mxu0 0.0
        %942 = vmatprep.subr.mxu0 0.0
        %943 = vmatpush1.msra.mxu0 0.0
        %944 = vmatprep.subr.mxu0 0.0
        %945 = vmatpush1.msra.mxu0 0.0
        %946 = vmatprep.subr.mxu0 0.0
        %947 = vmatpush1.msra.mxu0 0.0
        %948 = vmatprep.subr.mxu0 0.0
        %949 = vmatpush1.msra.mxu0 0.0
        %950 = vmatprep.subr.mxu0 0.0
        %951 = vmatpush1.msra.mxu0 0.0
        %952 = vmatprep.subr.mxu0 0.0
        %953 = vmatpush1.msra.mxu0 0.0
        %954 = vmatprep.subr.mxu0 0.0
        %955 = vmatpush1.msra.mxu0 0.0
        %956 = vmatprep.subr.mxu0 0.0
        %957 = vmatpush1.msra.mxu0 0.0
        %958 = vmatprep.subr.mxu0 0.0
        %959 = vmatpush1.msra.mxu0 0.0
        %960 = vmatprep.subr.mxu0 0.0
        %961 = vmatpush1.msra.mxu0 0.0
        %962 = vmatprep.subr.mxu0 0.0
        %963 = vmatpush1.msra.mxu0 0.0
        %964 = vmatprep.subr.mxu0 0.0
        %965 = vmatpush1.msra.mxu0 0.0
        %966 = vmatprep.subr.mxu0 0.0
        %967 = vmatpush1.msra.mxu0 0.0
        %968 = vmatprep.subr.mxu0 0.0
        %969 = vmatpush1.msra.mxu0 0.0
        %970 = vmatprep.subr.mxu0 0.0
        %971 = vmatpush1.msra.mxu0 0.0
        %972 = vmatprep.subr.mxu0 0.0
        %973 = vmatpush1.msra.mxu0 0.0
        %974 = vmatprep.subr.mxu0 0.0
        %975 = vmatpush1.msra.mxu0 0.0
        %976 = vmatprep.subr.mxu0 0.0
        %977 = vmatpush1.msra.mxu0 0.0
        %978 = vmatprep.subr.mxu0 0.0
        %979 = vmatpush1.msra.mxu0 0.0
        %980 = vmatprep.mubr.f32.mxu0 0.0
        %981 = vmatmul.mubr.f32.gmra.mrb[0].mxu0 %v914
        %v982 = vpop.f32.mrb[0].mxu0
        %v983 = vadd.f32 %v910, %v982
        %v984 = vpop.f32.mrb[0].mxu0
        %985 = vdwg.mxu0
        %v986 = vtanh.pop %v983
        %v987 = vld [vmem:[%s10] sm:$0xff]
        %v988 = vld [vmem:[%s10 + $0x8] sm:$0xff]
        %v989 = vld [vmem:[%s10 + $0x10] sm:$0xff]
        %v990 = vld [vmem:[%s10 + $0x18] sm:$0xff]
        %v991 = vld [vmem:[%s11] sm:$0x1]
        %v993 = vlaneseq
        %v994 = vshrl.u32 %v993, 7
        %v995 = vsub.s32 0, %v994
        %v996 = vrot.slane %v991, %v995
        %v999 = vsel %vm714, %v986, 0
        %1001 = vmatprep.subr.mxu0 0.0
        %1002 = vmatpush1.msra.mxu0 %v987
        %1003 = vmatprep.subr.mxu0 0.0
        %1004 = vmatpush1.msra.mxu0 %v988
        %1005 = vmatprep.subr.mxu0 0.0
        %1006 = vmatpush1.msra.mxu0 %v989
        %1007 = vmatprep.subr.mxu0 0.0
        %1008 = vmatpush1.msra.mxu0 %v990
        %1009 = vmatprep.subr.mxu0 0.0
        %1010 = vmatpush1.msra.mxu0 0.0
        %1011 = vmatprep.subr.mxu0 0.0
        %1012 = vmatpush1.msra.mxu0 0.0
        %1013 = vmatprep.subr.mxu0 0.0
        %1014 = vmatpush1.msra.mxu0 0.0
        %1015 = vmatprep.subr.mxu0 0.0
        %1016 = vmatpush1.msra.mxu0 0.0
        %1017 = vmatprep.subr.mxu0 0.0
        %1018 = vmatpush1.msra.mxu0 0.0
        %1019 = vmatprep.subr.mxu0 0.0
        %1020 = vmatpush1.msra.mxu0 0.0
        %1021 = vmatprep.subr.mxu0 0.0
        %1022 = vmatpush1.msra.mxu0 0.0
        %1023 = vmatprep.subr.mxu0 0.0
        %1024 = vmatpush1.msra.mxu0 0.0
        %1025 = vmatprep.subr.mxu0 0.0
        %1026 = vmatpush1.msra.mxu0 0.0
        %1027 = vmatprep.subr.mxu0 0.0
        %1028 = vmatpush1.msra.mxu0 0.0
        %1029 = vmatprep.subr.mxu0 0.0
        %1030 = vmatpush1.msra.mxu0 0.0
        %1031 = vmatprep.subr.mxu0 0.0
        %1032 = vmatpush1.msra.mxu0 0.0
        %1033 = vmatprep.subr.mxu0 0.0
        %1034 = vmatpush1.msra.mxu0 0.0
        %1035 = vmatprep.subr.mxu0 0.0
        %1036 = vmatpush1.msra.mxu0 0.0
        %1037 = vmatprep.subr.mxu0 0.0
        %1038 = vmatpush1.msra.mxu0 0.0
        %1039 = vmatprep.subr.mxu0 0.0
        %1040 = vmatpush1.msra.mxu0 0.0
        %1041 = vmatprep.subr.mxu0 0.0
        %1042 = vmatpush1.msra.mxu0 0.0
        %1043 = vmatprep.subr.mxu0 0.0
        %1044 = vmatpush1.msra.mxu0 0.0
        %1045 = vmatprep.subr.mxu0 0.0
        %1046 = vmatpush1.msra.mxu0 0.0
        %1047 = vmatprep.subr.mxu0 0.0
        %1048 = vmatpush1.msra.mxu0 0.0
        %1049 = vmatprep.subr.mxu0 0.0
        %1050 = vmatpush1.msra.mxu0 0.0
        %1051 = vmatprep.subr.mxu0 0.0
        %1052 = vmatpush1.msra.mxu0 0.0
        %1053 = vmatprep.subr.mxu0 0.0
        %1054 = vmatpush1.msra.mxu0 0.0
        %1055 = vmatprep.subr.mxu0 0.0
        %1056 = vmatpush1.msra.mxu0 0.0
        %1057 = vmatprep.subr.mxu0 0.0
        %1058 = vmatpush1.msra.mxu0 0.0
        %1059 = vmatprep.subr.mxu0 0.0
        %1060 = vmatpush1.msra.mxu0 0.0
        %1061 = vmatprep.subr.mxu0 0.0
        %1062 = vmatpush1.msra.mxu0 0.0
        %1063 = vmatprep.subr.mxu0 0.0
        %1064 = vmatpush1.msra.mxu0 0.0
        %1065 = vmatprep.mubr.f32.mxu0 0.0
        %1066 = vmatmul.mubr.f32.gmra.mrb[0].mxu0 %v999
        %v1067 = vpop.f32.mrb[0].mxu0
        %v1068 = vadd.f32 %v996, %v1067
        %v1069 = vpop.f32.mrb[0].mxu0
        %1070 = vdwg.mxu0
        %v1071 = vtanh.pop %v1068
        %v1072 = vld [vmem:[%s12] sm:$0xff]
        %v1073 = vld [vmem:[%s12 + $0x8] sm:$0xff]
        %v1074 = vld [vmem:[%s12 + $0x10] sm:$0xff]
        %v1075 = vld [vmem:[%s12 + $0x18] sm:$0xff]
        %v1076 = vld [vmem:[%s13] sm:$0x1]
        %v1078 = vlaneseq
        %v1079 = vshrl.u32 %v1078, 7
        %v1080 = vsub.s32 0, %v1079
        %v1081 = vrot.slane %v1076, %v1080
        %v1084 = vsel %vm714, %v1071, 0
        %1086 = vmatprep.subr.mxu0 0.0
        %1087 = vmatpush1.msra.mxu0 %v1072
        %1088 = vmatprep.subr.mxu0 0.0
        %1089 = vmatpush1.msra.mxu0 %v1073
        %1090 = vmatprep.subr.mxu0 0.0
        %1091 = vmatpush1.msra.mxu0 %v1074
        %1092 = vmatprep.subr.mxu0 0.0
        %1093 = vmatpush1.msra.mxu0 %v1075
        %1094 = vmatprep.subr.mxu0 0.0
        %1095 = vmatpush1.msra.mxu0 0.0
        %1096 = vmatprep.subr.mxu0 0.0
        %1097 = vmatpush1.msra.mxu0 0.0
        %1098 = vmatprep.subr.mxu0 0.0
        %1099 = vmatpush1.msra.mxu0 0.0
        %1100 = vmatprep.subr.mxu0 0.0
        %1101 = vmatpush1.msra.mxu0 0.0
        %1102 = vmatprep.subr.mxu0 0.0
        %1103 = vmatpush1.msra.mxu0 0.0
        %1104 = vmatprep.subr.mxu0 0.0
        %1105 = vmatpush1.msra.mxu0 0.0
        %1106 = vmatprep.subr.mxu0 0.0
        %1107 = vmatpush1.msra.mxu0 0.0
        %1108 = vmatprep.subr.mxu0 0.0
        %1109 = vmatpush1.msra.mxu0 0.0
        %1110 = vmatprep.subr.mxu0 0.0
        %1111 = vmatpush1.msra.mxu0 0.0
        %1112 = vmatprep.subr.mxu0 0.0
        %1113 = vmatpush1.msra.mxu0 0.0
        %1114 = vmatprep.subr.mxu0 0.0
        %1115 = vmatpush1.msra.mxu0 0.0
        %1116 = vmatprep.subr.mxu0 0.0
        %1117 = vmatpush1.msra.mxu0 0.0
        %1118 = vmatprep.subr.mxu0 0.0
        %1119 = vmatpush1.msra.mxu0 0.0
        %1120 = vmatprep.subr.mxu0 0.0
        %1121 = vmatpush1.msra.mxu0 0.0
        %1122 = vmatprep.subr.mxu0 0.0
        %1123 = vmatpush1.msra.mxu0 0.0
        %1124 = vmatprep.subr.mxu0 0.0
        %1125 = vmatpush1.msra.mxu0 0.0
        %1126 = vmatprep.subr.mxu0 0.0
        %1127 = vmatpush1.msra.mxu0 0.0
        %1128 = vmatprep.subr.mxu0 0.0
        %1129 = vmatpush1.msra.mxu0 0.0
        %1130 = vmatprep.subr.mxu0 0.0
        %1131 = vmatpush1.msra.mxu0 0.0
        %1132 = vmatprep.subr.mxu0 0.0
        %1133 = vmatpush1.msra.mxu0 0.0
        %1134 = vmatprep.subr.mxu0 0.0
        %1135 = vmatpush1.msra.mxu0 0.0
        %1136 = vmatprep.subr.mxu0 0.0
        %1137 = vmatpush1.msra.mxu0 0.0
        %1138 = vmatprep.subr.mxu0 0.0
        %1139 = vmatpush1.msra.mxu0 0.0
        %1140 = vmatprep.subr.mxu0 0.0
        %1141 = vmatpush1.msra.mxu0 0.0
        %1142 = vmatprep.subr.mxu0 0.0
        %1143 = vmatpush1.msra.mxu0 0.0
        %1144 = vmatprep.subr.mxu0 0.0
        %1145 = vmatpush1.msra.mxu0 0.0
        %1146 = vmatprep.subr.mxu0 0.0
        %1147 = vmatpush1.msra.mxu0 0.0
        %1148 = vmatprep.subr.mxu0 0.0
        %1149 = vmatpush1.msra.mxu0 0.0
        %1150 = vmatprep.mubr.f32.mxu0 0.0
        %1151 = vmatmul.mubr.f32.gmra.mrb[0].mxu0 %v1084
        %v1152 = vpop.f32.mrb[0].mxu0
        %v1153 = vadd.f32 %v1081, %v1152
        %v1154 = vpop.f32.mrb[0].mxu0
        %1155 = vdwg.mxu0
        %v1156 = vxor.u32 %v1153, 2147483648
        %v1157 = vmul.f32 %v1156, 1.442695
        %v1158 = vpow.pop %v1157
        %v1159 = vadd.f32 %v1158, 1.0
        %v1160 = vrcp.pop %v1159
        %v1161 = vmul.f32 1.0, %v1160
        %v1162 = vmul.f32 %v903, %v903
        %v1163 = vsel %vm912, %v1162, 0.0
        %1164 = vadd.xlane.f32.xlu0 %v1163
        %v1165 = vpop.xlane.xlu0 %1164
        %v1166 = vld [vmem:[%s14] sm:$0xff]
        %1167 = vmatprep.subr.mxu0 0.0
        %1168 = vmatpush1.msra.mxu0 %v1166
        %1169 = vmatprep.subr.mxu0 0.0
        %1170 = vmatpush1.msra.mxu0 0.0
        %1171 = vmatprep.subr.mxu0 0.0
        %1172 = vmatpush1.msra.mxu0 0.0
        %1173 = vmatprep.subr.mxu0 0.0
        %1174 = vmatpush1.msra.mxu0 0.0
        %1175 = vmatprep.subr.mxu0 0.0
        %1176 = vmatpush1.msra.mxu0 0.0
        %1177 = vmatprep.subr.mxu0 0.0
        %1178 = vmatpush1.msra.mxu0 0.0
        %1179 = vmatprep.subr.mxu0 0.0
        %1180 = vmatpush1.msra.mxu0 0.0
        %1181 = vmatprep.subr.mxu0 0.0
        %1182 = vmatpush1.msra.mxu0 0.0
        %1183 = vmatprep.subr.mxu0 0.0
        %1184 = vmatpush1.msra.mxu0 0.0
        %1185 = vmatprep.subr.mxu0 0.0
        %1186 = vmatpush1.msra.mxu0 0.0
        %1187 = vmatprep.subr.mxu0 0.0
        %1188 = vmatpush1.msra.mxu0 0.0
        %1189 = vmatprep.subr.mxu0 0.0
        %1190 = vmatpush1.msra.mxu0 0.0
        %1191 = vmatprep.subr.mxu0 0.0
        %1192 = vmatpush1.msra.mxu0 0.0
        %1193 = vmatprep.subr.mxu0 0.0
        %1194 = vmatpush1.msra.mxu0 0.0
        %1195 = vmatprep.subr.mxu0 0.0
        %1196 = vmatpush1.msra.mxu0 0.0
        %1197 = vmatprep.subr.mxu0 0.0
        %1198 = vmatpush1.msra.mxu0 0.0
        %1199 = vmatprep.subr.mxu0 0.0
        %1200 = vmatpush1.msra.mxu0 0.0
        %1201 = vmatprep.subr.mxu0 0.0
        %1202 = vmatpush1.msra.mxu0 0.0
        %1203 = vmatprep.subr.mxu0 0.0
        %1204 = vmatpush1.msra.mxu0 0.0
        %1205 = vmatprep.subr.mxu0 0.0
        %1206 = vmatpush1.msra.mxu0 0.0
        %1207 = vmatprep.subr.mxu0 0.0
        %1208 = vmatpush1.msra.mxu0 0.0
        %1209 = vmatprep.subr.mxu0 0.0
        %1210 = vmatpush1.msra.mxu0 0.0
        %1211 = vmatprep.subr.mxu0 0.0
        %1212 = vmatpush1.msra.mxu0 0.0
        %1213 = vmatprep.subr.mxu0 0.0
        %1214 = vmatpush1.msra.mxu0 0.0
        %1215 = vmatprep.subr.mxu0 0.0
        %1216 = vmatpush1.msra.mxu0 0.0
        %1217 = vmatprep.subr.mxu0 0.0
        %1218 = vmatpush1.msra.mxu0 0.0
        %1219 = vmatprep.subr.mxu0 0.0
        %1220 = vmatpush1.msra.mxu0 0.0
        %1221 = vmatprep.subr.mxu0 0.0
        %1222 = vmatpush1.msra.mxu0 0.0
        %1223 = vmatprep.subr.mxu0 0.0
        %1224 = vmatpush1.msra.mxu0 0.0
        %1225 = vmatprep.subr.mxu0 0.0
        %1226 = vmatpush1.msra.mxu0 0.0
        %1227 = vmatprep.subr.mxu0 0.0
        %1228 = vmatpush1.msra.mxu0 0.0
        %1229 = vmatprep.subr.mxu0 0.0
        %1230 = vmatpush1.msra.mxu0 0.0
        %1231 = vmatprep.mubr.f32.mxu0 0.0
        %1232 = vmatmul.mubr.f32.gmra.mrb[0].mxu0 %v914
        %v1233 = vpop.f32.mrb[0].mxu0
        %v1234 = vadd.f32 0.0, %v1233
        %v1235 = vpop.f32.mrb[0].mxu0
        %1236 = vdwg.mxu0
        %v1237 = vld [vmem:[%s15] sm:$0x1]
        %v1239 = vlaneseq
        %v1240 = vshrl.u32 %v1239, 7
        %v1241 = vsub.s32 0, %v1240
        %v1242 = vrot.slane %v1237, %v1241
        %v1244 = vadd.f32 %v1165, %v1242
        %v1245 = vmul.f32 %v1234, 2.0
        %v1246 = vsub.f32 %v1244, %v1245
        %v1247 = vmax.f32 %v1246, 0.0
        %v1248 = vmul.f32 %v1247, -2.0
        %v1249 = vmul.f32 %v1248, 1.442695
        %v1250 = vpow.pop %v1249
        %v1251 = vld [vmem:[%s16] sm:$0xff]
        %v1252 = vld [vmem:[%s16 + $0x8] sm:$0xff]
        %vm1253 = vcmask 130048
        %v1255 = vsel %vm1253, %v1250, 0
        %1257 = vmatprep.subr.mxu0 0.0
        %1258 = vmatpush1.msra.mxu0 %v1251
        %1259 = vmatprep.subr.mxu0 0.0
        %1260 = vmatpush1.msra.mxu0 %v1252
        %1261 = vmatprep.subr.mxu0 0.0
        %1262 = vmatpush1.msra.mxu0 0.0
        %1263 = vmatprep.subr.mxu0 0.0
        %1264 = vmatpush1.msra.mxu0 0.0
        %1265 = vmatprep.subr.mxu0 0.0
        %1266 = vmatpush1.msra.mxu0 0.0
        %1267 = vmatprep.subr.mxu0 0.0
        %1268 = vmatpush1.msra.mxu0 0.0
        %1269 = vmatprep.subr.mxu0 0.0
        %1270 = vmatpush1.msra.mxu0 0.0
        %1271 = vmatprep.subr.mxu0 0.0
        %1272 = vmatpush1.msra.mxu0 0.0
        %1273 = vmatprep.subr.mxu0 0.0
        %1274 = vmatpush1.msra.mxu0 0.0
        %1275 = vmatprep.subr.mxu0 0.0
        %1276 = vmatpush1.msra.mxu0 0.0
        %1277 = vmatprep.subr.mxu0 0.0
        %1278 = vmatpush1.msra.mxu0 0.0
        %1279 = vmatprep.subr.mxu0 0.0
        %1280 = vmatpush1.msra.mxu0 0.0
        %1281 = vmatprep.subr.mxu0 0.0
        %1282 = vmatpush1.msra.mxu0 0.0
        %1283 = vmatprep.subr.mxu0 0.0
        %1284 = vmatpush1.msra.mxu0 0.0
        %1285 = vmatprep.subr.mxu0 0.0
        %1286 = vmatpush1.msra.mxu0 0.0
        %1287 = vmatprep.subr.mxu0 0.0
        %1288 = vmatpush1.msra.mxu0 0.0
        %1289 = vmatprep.subr.mxu0 0.0
        %1290 = vmatpush1.msra.mxu0 0.0
        %1291 = vmatprep.subr.mxu0 0.0
        %1292 = vmatpush1.msra.mxu0 0.0
        %1293 = vmatprep.subr.mxu0 0.0
        %1294 = vmatpush1.msra.mxu0 0.0
        %1295 = vmatprep.subr.mxu0 0.0
        %1296 = vmatpush1.msra.mxu0 0.0
        %1297 = vmatprep.subr.mxu0 0.0
        %1298 = vmatpush1.msra.mxu0 0.0
        %1299 = vmatprep.subr.mxu0 0.0
        %1300 = vmatpush1.msra.mxu0 0.0
        %1301 = vmatprep.subr.mxu0 0.0
        %1302 = vmatpush1.msra.mxu0 0.0
        %1303 = vmatprep.subr.mxu0 0.0
        %1304 = vmatpush1.msra.mxu0 0.0
        %1305 = vmatprep.subr.mxu0 0.0
        %1306 = vmatpush1.msra.mxu0 0.0
        %1307 = vmatprep.subr.mxu0 0.0
        %1308 = vmatpush1.msra.mxu0 0.0
        %1309 = vmatprep.subr.mxu0 0.0
        %1310 = vmatpush1.msra.mxu0 0.0
        %1311 = vmatprep.subr.mxu0 0.0
        %1312 = vmatpush1.msra.mxu0 0.0
        %1313 = vmatprep.subr.mxu0 0.0
        %1314 = vmatpush1.msra.mxu0 0.0
        %1315 = vmatprep.subr.mxu0 0.0
        %1316 = vmatpush1.msra.mxu0 0.0
        %1317 = vmatprep.subr.mxu0 0.0
        %1318 = vmatpush1.msra.mxu0 0.0
        %1319 = vmatprep.subr.mxu0 0.0
        %1320 = vmatpush1.msra.mxu0 0.0
        %1321 = vmatprep.mubr.f32.mxu0 0.0
        %1322 = vmatmul.mubr.f32.gmra.mrb[0].mxu0 %v1255
        %v1323 = vpop.f32.mrb[0].mxu0
        %v1324 = vadd.f32 1e-06, %v1323
        %v1325 = vpop.f32.mrb[0].mxu0
        %1326 = vdwg.mxu0
        %v1327 = vrcp.pop %v1324
        %1329 = vrot.lane.b32.xlu0 %v1327, 64
        %v1330 = vpop.permute.xlu0 %1329
        %v1332 = vsel %vm628, %v1161, %v1330
        %1333 = vst [vmem:[%s593] sm:$0xff] %v1332
        %1335 = vrot.lane.b32.xlu0 %v870, 8
        %v1336 = vpop.permute.xlu0 %1335
        %1339 = vrot.lane.b32.xlu0 %v889, 8
        %v1340 = vpop.permute.xlu0 %1339
        %v1342 = vsel %vm912, %v903, %v1336
        %v1343 = vsel %vm1253, %v1342, %v1340
        %vm1344 = vcmask 195584
        %1345 = vst.msk [vmem:[%s611] sm:$0xff] %vm1344, %v1343
        %s1346 = sand.u32 %s409, 1
        %s1347 = scalar_lea.sflag [#allocation4], %s1346
        %s1348 = sand.u32 %s409, 1
        %s1349 = smul.addr %s1348, 8
        %s1350 = scalar_lea.vmem [#allocation5], %s1349
        %p1351 = scmp.lt.s32.totalorder %s34, 3
        %s1352 = scalar_select %p1351, %s34, 3
        %s1353 = smul.addr %s1352, 8
        %s1354 = scalar_lea.vmem %s18, %s1353
        // Predicated region
        $region93: #{tpu_custom_call.1} parent=87 // pred_check
          %p1355 = pneg %p419
        $region94: #{tpu_custom_call.1} parent=87 // pred_check_branch
          %1357 = sbr.rel (%p1355) target = $region96
        $region95: #{tpu_custom_call.1} parent=87 // pred_region
          %s1359 = ssub.s32 128, 128
          %1360 = vsyncadd %s1347, %s1359
          %s1361 = smul.addr %s34, 128
          %s1362 = scalar_lea.hbm %s17, %s1361
          %s1364 = sshll.u32 %s1350, 4
          %s1365 = int_to_ptr.vmem [resolvable:$true] %s1364
          %1367 = dma.vmem_to_hbm [thread:$0]  %s1365, 128, %s1362, %s1347
        $region96: #{tpu_custom_call.1} parent=87 // pred_fallthru
          _
        // Predicated region
        $region97: #{tpu_custom_call.1} parent=87 // pred_check
          %p1368 = pneg %p445
        $region98: #{tpu_custom_call.1} parent=87 // pred_check_branch
          %1370 = sbr.rel (%p1368) target = $region100
        $region99: #{tpu_custom_call.1} parent=87 // pred_region
          _
        $region100: #{tpu_custom_call.1} parent=87 // pred_fallthru
          _
      $region88: #{tpu_custom_call.1} parent=5 // pred_fallthru
        _
      %p1371 = scmp.le.s32.totalorder 2, %s29
      // Predicated region
      $region101: #{tpu_custom_call.1} parent=5 // pred_check
        %p1372 = pneg %p1371
      $region102: #{tpu_custom_call.1} parent=5 // pred_check_branch
        %1374 = sbr.rel (%p1372) target = $region104
      $region103: #{tpu_custom_call.1} parent=5 // pred_region
        %s1375 = ssub.s32 %s29, 2
        // Predicated region
        $region105: #{tpu_custom_call.1} parent=103 // pred_check
          %p1376 = pneg %p425
        $region106: #{tpu_custom_call.1} parent=103 // pred_check_branch
          %1378 = sbr.rel (%p1376) target = $region108
        $region107: #{tpu_custom_call.1} parent=103 // pred_region
          %s1379 = sand.u32 %s410, 1
          %s1380 = scalar_lea.sflag [#allocation4], %s1379
          %s1381 = sand.u32 %s410, 1
          %s1382 = smul.addr %s1381, 8
          %s1383 = scalar_lea.vmem [#allocation5], %s1382
          %1384 = dma.done %s1380, 128
        $region108: #{tpu_custom_call.1} parent=103 // pred_fallthru
          _
        // Predicated region
        $region109: #{tpu_custom_call.1} parent=103 // pred_check
          %p1385 = pneg %p451
        $region110: #{tpu_custom_call.1} parent=103 // pred_check_branch
          %1387 = sbr.rel (%p1385) target = $region112
        $region111: #{tpu_custom_call.1} parent=103 // pred_region
          %p1388 = scmp.lt.s32.totalorder %s35, 3
          %s1389 = scalar_select %p1388, %s35, 3
          %s1390 = smul.addr %s1389, 8
          %s1391 = scalar_lea.vmem %s18, %s1390
        $region112: #{tpu_custom_call.1} parent=103 // pred_fallthru
          _
      $region104: #{tpu_custom_call.1} parent=5 // pred_fallthru
        _
    $region6: #{tpu_custom_call.1} parent=1 // loop_footer
      %s33 = sadd.s32 1, %s29
    $region7: #{tpu_custom_call.1} parent=1 // loop_footer_branch
      %28 = sbr.rel target = $region3
    $region8: #{tpu_custom_call.1} parent=1 // loop_exit
      _
    %1392 = vsyncpa [#allocation3], 1
    %s1393 = scalar_lea.sflag [#allocation3], 1
    %1394 = vsyncpa %s1393, 1
    %1395 = vsyncpa [#allocation4], 1
    %s1396 = scalar_lea.sflag [#allocation4], 1
    %1397 = vsyncpa %s1396, 1

</llo_original>
